<compile_context>
chip_gen: v7x
topology: tpu7x:2x2x1
jax: 0.10.0
libtpu: 0.0.40
codegen_flags: <defaults>
</compile_context>

<pallas_src>
import functools

import jax
import jax.numpy as jnp
from jax.experimental import pallas as pl
from jax.experimental.pallas import tpu as pltpu


def _round_up(n: int, m: int) -> int:
    return ((n + m - 1) // m) * m


# ------------------------------ Pallas kernel ------------------------------ #

def _conv_moth_kernel(x_ref, w_ref, b_ref, o_ref, *, deltas, lout, apply_moth,
                      moth_channels, d_shift, row_lo, row_hi):
    """Fused conv (shifted matmuls) + bias + moth add for one batch image.

    x_ref: [1, Cin, Lin]      flattened padded image + zero tail,
                              Lin >= Lout + max(deltas)
    w_ref: [KH*KW, Cout, Cin] per-tap weight matrices (kh-major)
    b_ref: [Cout, 1]
    o_ref: [1, Cout, Lout]    conv(+moth) output on the flattened padded grid
    """
    cout = w_ref.shape[1]
    xv = x_ref[0]            # [Cin, Lin]
    wv = w_ref[...]          # [KH*KW, Cout, Cin]

    acc = jnp.zeros((cout, lout), jnp.float32)
    for k, dlt in enumerate(deltas):          # static, unrolled (KH*KW taps)
        xs = xv[:, dlt:dlt + lout]            # [Cin, Lout] static lane slice
        acc = acc + jnp.dot(wv[k], xs, preferred_element_type=jnp.float32)
    y = acc + b_ref[...]                      # bias broadcast over lanes

    if apply_moth:
        # diff[p] = |y[p + d_shift] - y[p - d_shift]| on the kept row range.
        # abs() makes the pltpu.roll direction convention irrelevant, and the
        # row-range mask guarantees no wrapped lane reaches a kept position.
        fwd = pltpu.roll(y, shift=d_shift, axis=1)
        bwd = pltpu.roll(y, shift=(lout - d_shift) % lout, axis=1)
        diff = jnp.abs(fwd - bwd)
        pos = jax.lax.broadcasted_iota(jnp.int32, (1, lout), 1)   # flat position
        ch = jax.lax.broadcasted_iota(jnp.int32, (cout, 1), 0)    # channel index
        mask = (pos >= row_lo) & (pos < row_hi) & (ch < moth_channels)
        y = y + jnp.where(mask, diff, 0.0)

    o_ref[0] = y.astype(o_ref.dtype)


# -------------------------------- wrapper ----------------------------------- #

def conv2d_moth_forward(x, weight, bias, *, stride=1, padding=0,
                        moth_channels=0.2, moth_stride=1, min_size=10,
                        use_bf16=False):
    """Pallas implementation of Conv2dMoth.forward.  x: [B, Cin, H, W] NCHW."""
    b, cin, h, w = x.shape
    cout, cin_w, kh, kw = weight.shape
    assert cin == cin_w, (cin, cin_w)
    if isinstance(moth_channels, float):
        moth_channels = int(moth_channels * cout)

    hp, wp = h + 2 * padding, w + 2 * padding
    ho = (hp - kh) // stride + 1
    wo = (wp - kw) // stride + 1

    l_img = hp * wp                                   # flattened padded image
    lout = _round_up(l_img, 128)                      # lane-dense output width
    max_delta = (kh - 1) * wp + (kw - 1)
    lin = _round_up(lout + max_delta, 128)            # input width incl. halo

    in_dtype = jnp.bfloat16 if use_bf16 else jnp.float32

    # Pad spatially, flatten H*W (contiguous), zero-pad the tail up to `lin`.
    xp = jnp.pad(x, ((0, 0), (0, 0), (padding, padding), (padding, padding)))
    x_flat = xp.reshape(b, cin, l_img)
    x_flat = jnp.pad(x_flat, ((0, 0), (0, 0), (0, lin - l_img))).astype(in_dtype)

    # weight -> [KH*KW, Cout, Cin] (kh-major, matching `deltas`).
    w_r = weight.transpose(2, 3, 0, 1).reshape(kh * kw, cout, cin).astype(in_dtype)
    bias2d = bias.reshape(cout, 1).astype(jnp.float32)

    # For output offset p = r*Wp + c, tap (ih, iw) reads p + ih*Wp + iw.
    deltas = tuple(ih * wp + iw for ih in range(kh) for iw in range(kw))

    ms = moth_stride
    apply_moth = (ho >= min_size) and moth_channels > 0 and (2 * ms <= ho - 1)
    d_shift = ms * stride * wp                          # +/- ms output rows
    row_lo = ms * stride * wp                           # first row with the add
    row_hi = ((ho - 1 - ms) * stride + 1) * wp          # exclusive upper bound

    kern = functools.partial(
        _conv_moth_kernel, deltas=deltas, lout=lout, apply_moth=apply_moth,
        moth_channels=moth_channels, d_shift=d_shift, row_lo=row_lo,
        row_hi=row_hi)

    itemsize = jnp.dtype(in_dtype).itemsize
    vmem_need = (2 * cin * lin * itemsize               # double-buffered input
                 + 2 * cout * lout * 4                  # double-buffered output
                 + kh * kw * cout * cin * itemsize + cout * 4
                 + 8 * cout * lout * 4)                 # in-kernel temporaries
    vmem_limit = int(max(2 * vmem_need, 16 * 1024 * 1024))

    out_flat = pl.pallas_call(
        kern,
        out_shape=jax.ShapeDtypeStruct((b, cout, lout), jnp.float32),
        grid=(b,),
        in_specs=[
            pl.BlockSpec((1, cin, lin), lambda i: (i, 0, 0)),
            pl.BlockSpec((kh * kw, cout, cin), lambda i: (0, 0, 0)),
            pl.BlockSpec((cout, 1), lambda i: (0, 0)),
        ],
        out_specs=pl.BlockSpec((1, cout, lout), lambda i: (i, 0, 0)),
        compiler_params=pltpu.CompilerParams(
            dimension_semantics=("parallel",),
            vmem_limit_bytes=vmem_limit),
    )(x_flat, w_r, bias2d)

    # Valid outputs live at rows ho*stride, cols wo*stride of the padded grid.
    out = out_flat[:, :, :l_img].reshape(b, cout, hp, wp)
    out = out[:, :, 0:(ho - 1) * stride + 1:stride,
                    0:(wo - 1) * stride + 1:stride]
    return out


# ------------------------------- reference ---------------------------------- #

def _reference(x, weight, bias, *, stride, padding, moth_channels, moth_stride,
               min_size):
    cout = weight.shape[0]
    if isinstance(moth_channels, float):
        moth_channels = int(moth_channels * cout)
    y = jax.lax.conv_general_dilated(
        x, weight, window_strides=(stride, stride),
        padding=[(padding, padding), (padding, padding)],
        dimension_numbers=("NCHW", "OIHW", "NCHW"))
    y = y + bias[None, :, None, None]
    if y.shape[2] >= min_size and moth_channels > 0:
        mc, ms = moth_channels, moth_stride
        d = jnp.abs(y[:, :mc, 2 * ms:, :] - y[:, :mc, :-2 * ms, :])
        y = y.at[:, :mc, ms:-ms, :].add(d)
    return y


# ---------------------------------- main ------------------------------------ #

if __name__ == "__main__":
    in_channels, out_channels, kernel_size = 4, 8, 3
    stride, padding = 1, 1
    moth_channels, moth_stride, min_size = 0.25, 1, 10   # -> 2 moth channels

    key = jax.random.PRNGKey(0)
    kx, kw_, kb = jax.random.split(key, 3)
    x = jax.random.normal(kx, (2, in_channels, 16, 16), dtype=jnp.float32)
    weight = 0.1 * jax.random.normal(
        kw_, (out_channels, in_channels, kernel_size, kernel_size),
        dtype=jnp.float32)
    bias = 0.1 * jax.random.normal(kb, (out_channels,), dtype=jnp.float32)

    ref = _reference(x, weight, bias, stride=stride, padding=padding,
                     moth_channels=moth_channels, moth_stride=moth_stride,
                     min_size=min_size)
    ref = jax.block_until_ready(ref)

    # f32 MXU path (strict check).
    out = conv2d_moth_forward(
        x, weight, bias, stride=stride, padding=padding,
        moth_channels=moth_channels, moth_stride=moth_stride,
        min_size=min_size, use_bf16=False)
    out = jax.block_until_ready(out)
    assert out.shape == ref.shape, (out.shape, ref.shape)
    assert jnp.allclose(out, ref, rtol=1e-4, atol=1e-4), float(
        jnp.max(jnp.abs(out - ref)))

    # bf16 MXU-input path (native bf16 on v6e/v7x), looser tolerance.
    out_bf16 = conv2d_moth_forward(
        x, weight, bias, stride=stride, padding=padding,
        moth_channels=moth_channels, moth_stride=moth_stride,
        min_size=min_size, use_bf16=True)
    out_bf16 = jax.block_until_ready(out_bf16)
    assert out_bf16.shape == ref.shape, (out_bf16.shape, ref.shape)
    assert jnp.allclose(out_bf16, ref, rtol=5e-2, atol=5e-2), float(
        jnp.max(jnp.abs(out_bf16 - ref)))

    print("KERNEL_OK")
</pallas_src>

<mosaic_0001>
module attributes {stable_mosaic.version = 11 : i64} {
  func.func @_conv_moth_kernel(%arg0: i32, %arg1: memref<1x4x512xf32, #tpu.memory_space<vmem>>, %arg2: memref<9x8x4xf32, #tpu.memory_space<vmem>>, %arg3: memref<8x1xf32, #tpu.memory_space<vmem>>, %arg4: memref<1x8x384xf32, #tpu.memory_space<vmem>>) attributes {dimension_semantics = [#tpu.dimension_semantics<parallel>], iteration_bounds = array<i64: 2>, scalar_prefetch = 0 : i64, scratch_operands = 0 : i64, tpu.core_type = #tpu.core_type<tc>, window_params = [{transform_indices = @transform_0, window_bounds = array<i64: 1, 4, 512>}, {pipeline_mode = #tpu.pipeline_mode<synchronous>, transform_indices = @transform_1, window_bounds = array<i64: 9, 8, 4>}, {pipeline_mode = #tpu.pipeline_mode<synchronous>, transform_indices = @transform_2, window_bounds = array<i64: 8, 1>}, {transform_indices = @transform_3, window_bounds = array<i64: 1, 8, 384>}]} {
    %c0 = arith.constant 0 : index
    %c0_0 = arith.constant 0 : index
    %c0_1 = arith.constant 0 : index
    %0 = vector.load %arg1[%c0, %c0_0, %c0_1] : memref<1x4x512xf32, #tpu.memory_space<vmem>>, vector<1x4x512xf32>
    %1 = vector.shape_cast %0 : vector<1x4x512xf32> to vector<4x512xf32>
    %c0_2 = arith.constant 0 : index
    %c0_3 = arith.constant 0 : index
    %c0_4 = arith.constant 0 : index
    %2 = vector.load %arg2[%c0_2, %c0_3, %c0_4] : memref<9x8x4xf32, #tpu.memory_space<vmem>>, vector<9x8x4xf32>
    %cst = arith.constant 0.000000e+00 : f32
    %3 = vector.broadcast %cst : f32 to vector<8x384xf32>
    %4 = vector.extract_strided_slice %1 {offsets = [0, 0], sizes = [4, 384], strides = [1, 1]} : vector<4x512xf32> to vector<4x384xf32>
    %5 = vector.extract_strided_slice %2 {offsets = [0, 0, 0], sizes = [1, 8, 4], strides = [1, 1, 1]} : vector<9x8x4xf32> to vector<1x8x4xf32>
    %6 = vector.shape_cast %5 : vector<1x8x4xf32> to vector<8x4xf32>
    %cst_5 = arith.constant dense<0.000000e+00> : vector<8x384xf32>
    %7 = tpu.matmul %6, %4, %cst_5 {dimension_numbers = #tpu.dot_dimension_numbers<[1], [0], [0], [1], [0, 0, 1, 1], [], []>} : vector<8x4xf32>, vector<4x384xf32>, vector<8x384xf32> -> vector<8x384xf32>
    %8 = arith.addf %3, %7 : vector<8x384xf32>
    %9 = vector.extract_strided_slice %1 {offsets = [0, 1], sizes = [4, 384], strides = [1, 1]} : vector<4x512xf32> to vector<4x384xf32>
    %10 = vector.extract_strided_slice %2 {offsets = [1, 0, 0], sizes = [1, 8, 4], strides = [1, 1, 1]} : vector<9x8x4xf32> to vector<1x8x4xf32>
    %11 = vector.shape_cast %10 : vector<1x8x4xf32> to vector<8x4xf32>
    %cst_6 = arith.constant dense<0.000000e+00> : vector<8x384xf32>
    %12 = tpu.matmul %11, %9, %cst_6 {dimension_numbers = #tpu.dot_dimension_numbers<[1], [0], [0], [1], [0, 0, 1, 1], [], []>} : vector<8x4xf32>, vector<4x384xf32>, vector<8x384xf32> -> vector<8x384xf32>
    %13 = arith.addf %8, %12 : vector<8x384xf32>
    %14 = vector.extract_strided_slice %1 {offsets = [0, 2], sizes = [4, 384], strides = [1, 1]} : vector<4x512xf32> to vector<4x384xf32>
    %15 = vector.extract_strided_slice %2 {offsets = [2, 0, 0], sizes = [1, 8, 4], strides = [1, 1, 1]} : vector<9x8x4xf32> to vector<1x8x4xf32>
    %16 = vector.shape_cast %15 : vector<1x8x4xf32> to vector<8x4xf32>
    %cst_7 = arith.constant dense<0.000000e+00> : vector<8x384xf32>
    %17 = tpu.matmul %16, %14, %cst_7 {dimension_numbers = #tpu.dot_dimension_numbers<[1], [0], [0], [1], [0, 0, 1, 1], [], []>} : vector<8x4xf32>, vector<4x384xf32>, vector<8x384xf32> -> vector<8x384xf32>
    %18 = arith.addf %13, %17 : vector<8x384xf32>
    %19 = vector.extract_strided_slice %1 {offsets = [0, 18], sizes = [4, 384], strides = [1, 1]} : vector<4x512xf32> to vector<4x384xf32>
    %20 = vector.extract_strided_slice %2 {offsets = [3, 0, 0], sizes = [1, 8, 4], strides = [1, 1, 1]} : vector<9x8x4xf32> to vector<1x8x4xf32>
    %21 = vector.shape_cast %20 : vector<1x8x4xf32> to vector<8x4xf32>
    %cst_8 = arith.constant dense<0.000000e+00> : vector<8x384xf32>
    %22 = tpu.matmul %21, %19, %cst_8 {dimension_numbers = #tpu.dot_dimension_numbers<[1], [0], [0], [1], [0, 0, 1, 1], [], []>} : vector<8x4xf32>, vector<4x384xf32>, vector<8x384xf32> -> vector<8x384xf32>
    %23 = arith.addf %18, %22 : vector<8x384xf32>
    %24 = vector.extract_strided_slice %1 {offsets = [0, 19], sizes = [4, 384], strides = [1, 1]} : vector<4x512xf32> to vector<4x384xf32>
    %25 = vector.extract_strided_slice %2 {offsets = [4, 0, 0], sizes = [1, 8, 4], strides = [1, 1, 1]} : vector<9x8x4xf32> to vector<1x8x4xf32>
    %26 = vector.shape_cast %25 : vector<1x8x4xf32> to vector<8x4xf32>
    %cst_9 = arith.constant dense<0.000000e+00> : vector<8x384xf32>
    %27 = tpu.matmul %26, %24, %cst_9 {dimension_numbers = #tpu.dot_dimension_numbers<[1], [0], [0], [1], [0, 0, 1, 1], [], []>} : vector<8x4xf32>, vector<4x384xf32>, vector<8x384xf32> -> vector<8x384xf32>
    %28 = arith.addf %23, %27 : vector<8x384xf32>
    %29 = vector.extract_strided_slice %1 {offsets = [0, 20], sizes = [4, 384], strides = [1, 1]} : vector<4x512xf32> to vector<4x384xf32>
    %30 = vector.extract_strided_slice %2 {offsets = [5, 0, 0], sizes = [1, 8, 4], strides = [1, 1, 1]} : vector<9x8x4xf32> to vector<1x8x4xf32>
    %31 = vector.shape_cast %30 : vector<1x8x4xf32> to vector<8x4xf32>
    %cst_10 = arith.constant dense<0.000000e+00> : vector<8x384xf32>
    %32 = tpu.matmul %31, %29, %cst_10 {dimension_numbers = #tpu.dot_dimension_numbers<[1], [0], [0], [1], [0, 0, 1, 1], [], []>} : vector<8x4xf32>, vector<4x384xf32>, vector<8x384xf32> -> vector<8x384xf32>
    %33 = arith.addf %28, %32 : vector<8x384xf32>
    %34 = vector.extract_strided_slice %1 {offsets = [0, 36], sizes = [4, 384], strides = [1, 1]} : vector<4x512xf32> to vector<4x384xf32>
    %35 = vector.extract_strided_slice %2 {offsets = [6, 0, 0], sizes = [1, 8, 4], strides = [1, 1, 1]} : vector<9x8x4xf32> to vector<1x8x4xf32>
    %36 = vector.shape_cast %35 : vector<1x8x4xf32> to vector<8x4xf32>
    %cst_11 = arith.constant dense<0.000000e+00> : vector<8x384xf32>
    %37 = tpu.matmul %36, %34, %cst_11 {dimension_numbers = #tpu.dot_dimension_numbers<[1], [0], [0], [1], [0, 0, 1, 1], [], []>} : vector<8x4xf32>, vector<4x384xf32>, vector<8x384xf32> -> vector<8x384xf32>
    %38 = arith.addf %33, %37 : vector<8x384xf32>
    %39 = vector.extract_strided_slice %1 {offsets = [0, 37], sizes = [4, 384], strides = [1, 1]} : vector<4x512xf32> to vector<4x384xf32>
    %40 = vector.extract_strided_slice %2 {offsets = [7, 0, 0], sizes = [1, 8, 4], strides = [1, 1, 1]} : vector<9x8x4xf32> to vector<1x8x4xf32>
    %41 = vector.shape_cast %40 : vector<1x8x4xf32> to vector<8x4xf32>
    %cst_12 = arith.constant dense<0.000000e+00> : vector<8x384xf32>
    %42 = tpu.matmul %41, %39, %cst_12 {dimension_numbers = #tpu.dot_dimension_numbers<[1], [0], [0], [1], [0, 0, 1, 1], [], []>} : vector<8x4xf32>, vector<4x384xf32>, vector<8x384xf32> -> vector<8x384xf32>
    %43 = arith.addf %38, %42 : vector<8x384xf32>
    %44 = vector.extract_strided_slice %1 {offsets = [0, 38], sizes = [4, 384], strides = [1, 1]} : vector<4x512xf32> to vector<4x384xf32>
    %45 = vector.extract_strided_slice %2 {offsets = [8, 0, 0], sizes = [1, 8, 4], strides = [1, 1, 1]} : vector<9x8x4xf32> to vector<1x8x4xf32>
    %46 = vector.shape_cast %45 : vector<1x8x4xf32> to vector<8x4xf32>
    %cst_13 = arith.constant dense<0.000000e+00> : vector<8x384xf32>
    %47 = tpu.matmul %46, %44, %cst_13 {dimension_numbers = #tpu.dot_dimension_numbers<[1], [0], [0], [1], [0, 0, 1, 1], [], []>} : vector<8x4xf32>, vector<4x384xf32>, vector<8x384xf32> -> vector<8x384xf32>
    %48 = arith.addf %43, %47 : vector<8x384xf32>
    %c0_14 = arith.constant 0 : index
    %c0_15 = arith.constant 0 : index
    %49 = vector.load %arg3[%c0_14, %c0_15] : memref<8x1xf32, #tpu.memory_space<vmem>>, vector<8x1xf32>
    %50 = vector.broadcast %49 : vector<8x1xf32> to vector<8x384xf32>
    %51 = arith.addf %48, %50 : vector<8x384xf32>
    %c18_i32 = arith.constant 18 : i32
    %52 = tpu.dynamic_rotate %51 by %c18_i32 dim 1 : vector<8x384xf32>, i32 -> vector<8x384xf32>
    %c366_i32 = arith.constant 366 : i32
    %53 = tpu.dynamic_rotate %51 by %c366_i32 dim 1 : vector<8x384xf32>, i32 -> vector<8x384xf32>
    %54 = arith.subf %52, %53 : vector<8x384xf32>
    %55 = math.absf %54 : vector<8x384xf32>
    %56 = tpu.iota {dimensions = array<i32: 1>} : vector<1x384xi32>
    %57 = tpu.iota {dimensions = array<i32: 0>} : vector<8x1xi32>
    %c18_i32_16 = arith.constant 18 : i32
    %58 = vector.broadcast %c18_i32_16 : i32 to vector<1x384xi32>
    %59 = arith.cmpi sge, %56, %58 : vector<1x384xi32>
    %c270_i32 = arith.constant 270 : i32
    %60 = vector.broadcast %c270_i32 : i32 to vector<1x384xi32>
    %61 = arith.cmpi slt, %56, %60 : vector<1x384xi32>
    %62 = arith.andi %59, %61 : vector<1x384xi1>
    %c2_i32 = arith.constant 2 : i32
    %63 = vector.broadcast %c2_i32 : i32 to vector<8x1xi32>
    %64 = arith.cmpi slt, %57, %63 : vector<8x1xi32>
    %65 = vector.broadcast %62 : vector<1x384xi1> to vector<8x384xi1>
    %66 = vector.broadcast %64 : vector<8x1xi1> to vector<8x384xi1>
    %67 = arith.andi %65, %66 : vector<8x384xi1>
    %cst_17 = arith.constant 0.000000e+00 : f32
    %68 = vector.broadcast %cst_17 : f32 to vector<8x384xf32>
    %69 = arith.select %67, %55, %68 : vector<8x384xi1>, vector<8x384xf32>
    %70 = arith.addf %51, %69 : vector<8x384xf32>
    %c0_18 = arith.constant 0 : index
    %c0_19 = arith.constant 0 : index
    %c0_20 = arith.constant 0 : index
    %71 = vector.load %arg4[%c0_18, %c0_19, %c0_20] : memref<1x8x384xf32, #tpu.memory_space<vmem>>, vector<1x8x384xf32>
    %72 = vector.shape_cast %71 : vector<1x8x384xf32> to vector<8x384xf32>
    %73 = vector.shape_cast %70 : vector<8x384xf32> to vector<1x8x384xf32>
    tpu.vector_store %arg4[%c0_18, %c0_19, %c0_20], %73 {strides = array<i32>} : memref<1x8x384xf32, #tpu.memory_space<vmem>>, vector<1x8x384xf32>,
    return
  }
  func.func @transform_0(%arg0: i32) -> (i32, i32, i32) {
    %c0_i32 = arith.constant 0 : i32
    %c0_i32_0 = arith.constant 0 : i32
    %c0_i32_1 = arith.constant 0 : i32
    return %arg0, %c0_i32, %c0_i32_0 : i32, i32, i32
  }
  func.func @transform_1(%arg0: i32) -> (i32, i32, i32) {
    %c0_i32 = arith.constant 0 : i32
    %c0_i32_0 = arith.constant 0 : i32
    %c0_i32_1 = arith.constant 0 : i32
    %c0_i32_2 = arith.constant 0 : i32
    return %c0_i32, %c0_i32_0, %c0_i32_1 : i32, i32, i32
  }
  func.func @transform_2(%arg0: i32) -> (i32, i32) {
    %c0_i32 = arith.constant 0 : i32
    %c0_i32_0 = arith.constant 0 : i32
    %c0_i32_1 = arith.constant 0 : i32
    return %c0_i32, %c0_i32_0 : i32, i32
  }
  func.func @transform_3(%arg0: i32) -> (i32, i32, i32) {
    %c0_i32 = arith.constant 0 : i32
    %c0_i32_0 = arith.constant 0 : i32
    %c0_i32_1 = arith.constant 0 : i32
    return %arg0, %c0_i32, %c0_i32_0 : i32, i32, i32
  }
}

</mosaic_0001>

<llo_original>
// kernel: tpu_custom_call.1
$region0: #{tpu_custom_call.1}
  #allocation0 [shape = 'u32[]', space=smem, size = 0x4, offset = 0x4, fixed_abs, tag = 'smem constant byte address 0x4 - core index']
  #allocation1 [shape = 'u32[144,128]{1,0:T(1,128)}', space=vmem, size = 0x12000, scoped, tag = 'internal scratch']
  %s0 = inlined_call_operand.vmem [shape: f32[2,4,512], index: 0, kind: input, shape index: {}]
  %s1 = inlined_call_operand.vmem [shape: f32[9,8,4], index: 1, kind: input, shape index: {}]
  %s2 = inlined_call_operand.vmem [shape: f32[8,1], index: 2, kind: input, shape index: {}]
  %s3 = inlined_call_operand.hbm [shape: f32[2,8,384], index: 3, kind: output, shape index: {}]
  %s4 = sld [smem:[#allocation0]]
  $region45: #{tpu_custom_call.1} parent=0
    _
  %s6 = ssub.s32 1, %s4
  %s7 = scalar_select 0, %s6, %s4
  $region1: #{tpu_custom_call.1} parent=0
    #allocation2 [shape = 'u8[24576]{0}', space=vmem, size = 0x6000, scoped, tag = 'output window, operand 0']
    #allocation3 [shape = 's32[2]{0}', space=sflag, size = 0x8, scoped, tag = 'scoped memory for tpu_custom_call.1']
    %8 = vsyncpa [#allocation3], 0
    %s9 = scalar_lea.sflag [#allocation3], 1
    %10 = vsyncpa %s9, 0
    loop: start=0, step=1, limit=4
    $region2: #{tpu_custom_call.1} parent=1 // loop_pre_header
      _
    $region3: #{tpu_custom_call.1} parent=1 // loop_header
      %s12 = sphi 0, %s16
      %p13 = scmp.ge.s32.totalorder %s12, 4
      %s22 = sphi 0, %s24
      %s25 = sphi 0, %s22
      %s26 = sphi 0, %s25
      %s42 = sphi 0, %s26
      %s46 = sphi 0, %s46
      %s48 = sphi 0, %s46
      %s49 = sphi 0, %s48
      %s63 = sphi 0, %s49
      %s67 = sphi 0, %s67
      %s69 = sphi 0, %s67
      %s70 = sphi 0, %s69
      %s84 = sphi 0, %s70
      %s90 = sphi 0, %s92
      %s93 = sphi 0, %s90
      %s94 = sphi 0, %s93
      %s110 = sphi 0, %s94
    $region4: #{tpu_custom_call.1} parent=1 // loop_header_branch
      %15 = sbr.rel (%p13) target = $region8
    $region5: #{tpu_custom_call.1} parent=1 // loop_body
      %s17 = ssub.s32 %s12, 1
      %s18 = ssub.s32 %s12, 2
      %s19 = sadd.s32 %s12, 1
      %s20 = ssub.s32 %s12, %s19
      %p21 = scmp.eq.s32.totalorder %s20, 0
      %s23 = sadd.s32 %s22, 1
      %s24 = scalar_select %p21, %s22, %s23
      %p27 = pneg %p21
      %p28 = scmp.eq.s32.totalorder %s12, 1
      %p29 = por %p27, %p28
      %p30 = scmp.ne.s32.totalorder %s22, %s25
      %p31 = scmp.eq.s32.totalorder %s12, 0
      %p32 = por %p30, %p31
      %p33 = scmp.ne.s32.totalorder %s22, %s25
      %p34 = scmp.eq.s32.totalorder %s17, 1
      %p35 = por %p33, %p34
      %p36 = scmp.ne.s32.totalorder %s25, %s26
      %p37 = scmp.eq.s32.totalorder %s17, 0
      %p38 = por %p36, %p37
      %p39 = scmp.ne.s32.totalorder %s25, %s26
      %p40 = scmp.eq.s32.totalorder %s18, 1
      %p41 = por %p39, %p40
      %p43 = scmp.ne.s32.totalorder %s26, %s42
      %p44 = scmp.eq.s32.totalorder %s18, 0
      %p45 = por %p43, %p44
      %s47 = sadd.s32 %s46, 1
      %p50 = scmp.eq.s32.totalorder %s12, 1
      %p51 = scmp.ne.s32.totalorder %s46, %s48
      %p52 = scmp.eq.s32.totalorder %s12, 0
      %p53 = por %p51, %p52
      %p54 = scmp.ne.s32.totalorder %s46, %s48
      %p55 = scmp.eq.s32.totalorder %s17, 1
      %p56 = por %p54, %p55
      %p57 = scmp.ne.s32.totalorder %s48, %s49
      %p58 = scmp.eq.s32.totalorder %s17, 0
      %p59 = por %p57, %p58
      %p60 = scmp.ne.s32.totalorder %s48, %s49
      %p61 = scmp.eq.s32.totalorder %s18, 1
      %p62 = por %p60, %p61
      %p64 = scmp.ne.s32.totalorder %s49, %s63
      %p65 = scmp.eq.s32.totalorder %s18, 0
      %p66 = por %p64, %p65
      %s68 = sadd.s32 %s67, 1
      %p71 = scmp.eq.s32.totalorder %s12, 1
      %p72 = scmp.ne.s32.totalorder %s67, %s69
      %p73 = scmp.eq.s32.totalorder %s12, 0
      %p74 = por %p72, %p73
      %p75 = scmp.ne.s32.totalorder %s67, %s69
      %p76 = scmp.eq.s32.totalorder %s17, 1
      %p77 = por %p75, %p76
      %p78 = scmp.ne.s32.totalorder %s69, %s70
      %p79 = scmp.eq.s32.totalorder %s17, 0
      %p80 = por %p78, %p79
      %p81 = scmp.ne.s32.totalorder %s69, %s70
      %p82 = scmp.eq.s32.totalorder %s18, 1
      %p83 = por %p81, %p82
      %p85 = scmp.ne.s32.totalorder %s70, %s84
      %p86 = scmp.eq.s32.totalorder %s18, 0
      %p87 = por %p85, %p86
      %s88 = ssub.s32 %s12, %s19
      %p89 = scmp.eq.s32.totalorder %s88, 0
      %s91 = sadd.s32 %s90, 1
      %s92 = scalar_select %p89, %s90, %s91
      %p95 = pneg %p89
      %p96 = scmp.eq.s32.totalorder %s12, 1
      %p97 = por %p95, %p96
      %p98 = scmp.ne.s32.totalorder %s90, %s93
      %p99 = scmp.eq.s32.totalorder %s12, 0
      %p100 = por %p98, %p99
      %p101 = scmp.ne.s32.totalorder %s90, %s93
      %p102 = scmp.eq.s32.totalorder %s17, 1
      %p103 = por %p101, %p102
      %p104 = scmp.ne.s32.totalorder %s93, %s94
      %p105 = scmp.eq.s32.totalorder %s17, 0
      %p106 = por %p104, %p105
      %p107 = scmp.ne.s32.totalorder %s93, %s94
      %p108 = scmp.eq.s32.totalorder %s18, 1
      %p109 = por %p107, %p108
      %p111 = scmp.ne.s32.totalorder %s94, %s110
      %p112 = scmp.eq.s32.totalorder %s18, 0
      %p113 = por %p111, %p112
      %p114 = scmp.le.s32.totalorder 1, %s12
      %p115 = scmp.lt.s32.totalorder %s12, 3
      %p116 = pnand %p114, %p115
      %p117 = pneg %p116
      // Predicated region
      $region9: #{tpu_custom_call.1} parent=5 // pred_check
        _
      $region10: #{tpu_custom_call.1} parent=5 // pred_check_branch
        %119 = sbr.rel (%p116) target = $region12
      $region11: #{tpu_custom_call.1} parent=5 // pred_region
        %s120 = ssub.s32 %s12, 1
        // Predicated region
        $region13: #{tpu_custom_call.1} parent=11 // pred_check
          %p121 = pneg %p59
        $region14: #{tpu_custom_call.1} parent=11 // pred_check_branch
          %123 = sbr.rel (%p121) target = $region16
        $region15: #{tpu_custom_call.1} parent=11 // pred_region
          _
        $region16: #{tpu_custom_call.1} parent=11 // pred_fallthru
          _
        // Predicated region
        $region17: #{tpu_custom_call.1} parent=11 // pred_check
          %p124 = pneg %p80
        $region18: #{tpu_custom_call.1} parent=11 // pred_check_branch
          %126 = sbr.rel (%p124) target = $region20
        $region19: #{tpu_custom_call.1} parent=11 // pred_region
          _
        $region20: #{tpu_custom_call.1} parent=11 // pred_fallthru
          _
      $region12: #{tpu_custom_call.1} parent=5 // pred_fallthru
        _
      %p127 = scmp.lt.s32.totalorder %s12, 2
      // Predicated region
      $region21: #{tpu_custom_call.1} parent=5 // pred_check
        %p128 = pneg %p127
      $region22: #{tpu_custom_call.1} parent=5 // pred_check_branch
        %130 = sbr.rel (%p128) target = $region24
      $region23: #{tpu_custom_call.1} parent=5 // pred_region
        // Predicated region
        $region25: #{tpu_custom_call.1} parent=23 // pred_check
          %p131 = pneg %p32
        $region26: #{tpu_custom_call.1} parent=23 // pred_check_branch
          %133 = sbr.rel (%p131) target = $region28
        $region27: #{tpu_custom_call.1} parent=23 // pred_region
          %p134 = scmp.lt.s32.totalorder %s12, 1
          %s135 = scalar_select %p134, %s12, 1
          %s136 = smul.addr %s135, 4
          %s137 = smul.addr %s136, 4
          %s138 = scalar_lea.vmem %s0, %s137
        $region28: #{tpu_custom_call.1} parent=23 // pred_fallthru
          _
      $region24: #{tpu_custom_call.1} parent=5 // pred_fallthru
        _
      %p139 = scmp.le.s32.totalorder 1, %s12
      %p140 = scmp.lt.s32.totalorder %s12, 3
      %p141 = pnand %p139, %p140
      %p142 = pneg %p141
      // Predicated region
      $region29: #{tpu_custom_call.1} parent=5 // pred_check
        _
      $region30: #{tpu_custom_call.1} parent=5 // pred_check_branch
        %144 = sbr.rel (%p141) target = $region32
      $region31: #{tpu_custom_call.1} parent=5 // pred_region
        %s145 = ssub.s32 %s12, 1
        %p146 = scmp.lt.s32.totalorder %s17, 1
        %s147 = scalar_select %p146, %s17, 1
        %s148 = smul.addr %s147, 4
        %s149 = smul.addr %s148, 4
        %s150 = scalar_lea.vmem %s0, %s149
        %p151 = pneg %p38
        %p152 = pneg %p35
        %p153 = pneg %p59
        %p154 = pneg %p56
        %p155 = pneg %p80
        %p156 = pneg %p77
        %p157 = pneg %p106
        %p158 = pneg %p103
        %s159 = sand.u32 %s93, 1
        %s160 = scalar_lea.sflag [#allocation3], %s159
        %s161 = sand.u32 %s93, 1
        %s162 = smul.addr %s161, 24
        %s163 = scalar_lea.vmem [#allocation2], %s162
        %p164 = scmp.lt.s32.totalorder %s17, 1
        %s165 = scalar_select %p164, %s17, 1
        %s166 = smul.addr %s165, 4
        %s167 = smul.addr %s166, 4
        %s168 = scalar_lea.vmem %s0, %s167
        %v169 = vld [vmem:[%s168] sm:$0xff]
        %v170 = vld [vmem:[%s168 + $0x8] sm:$0xff]
        %v171 = vld [vmem:[%s1] sm:$0xff]
        %v172 = vld [vmem:[%s1 + $0x8] sm:$0xff]
        %v173 = vld [vmem:[%s1 + $0x10] sm:$0xff]
        %v174 = vld [vmem:[%s1 + $0x18] sm:$0xff]
        %v175 = vld [vmem:[%s1 + $0x20] sm:$0xff]
        %v176 = vld [vmem:[%s1 + $0x28] sm:$0xff]
        %v177 = vld [vmem:[%s1 + $0x30] sm:$0xff]
        %v178 = vld [vmem:[%s1 + $0x38] sm:$0xff]
        %v179 = vld [vmem:[%s1 + $0x40] sm:$0xff]
        %v182 = vcombine.high %v169, %v169
        %v183 = vcombine.high %v170, %v170
        %184 = vrot.lane.b32.xlu0 %v169, 127
        %v185 = vpop.permute.xlu0 %184
        %186 = vrot.lane.b32.xlu0 %v182, 127
        %v187 = vpop.permute.xlu0 %186
        %188 = vrot.lane.b32.xlu0 %v170, 127
        %v189 = vpop.permute.xlu0 %188
        %190 = vrot.lane.b32.xlu0 %v183, 127
        %v191 = vpop.permute.xlu0 %190
        %vm192 = vcmask 1039360
        %v193 = vsel %vm192, %v185, %v187
        %v194 = vsel %vm192, %v187, %v189
        %v195 = vsel %vm192, %v189, %v191
        %vm196 = vcmask 31744
        %v198 = vsel %vm196, %v172, 0
        %vm200 = vcmask 1043456
        %v201 = vsel %vm200, %v193, 0
        %v203 = vsel %vm200, %v194, 0
        %v205 = vsel %vm200, %v195, 0
        %207 = vmatprep.subr.mxu0 %v203
        %208 = vmatpush1.msra.mxu0 %v201
        %209 = vmatprep.subr.mxu0 0.0
        %210 = vmatpush1.msra.mxu0 0.0
        %211 = vmatprep.subr.mxu0 0.0
        %212 = vmatpush1.msra.mxu0 0.0
        %213 = vmatprep.subr.mxu0 0.0
        %214 = vmatpush1.msra.mxu0 0.0
        %215 = vmatprep.subr.mxu0 0.0
        %216 = vmatpush1.msra.mxu0 0.0
        %217 = vmatprep.subr.mxu0 0.0
        %218 = vmatpush1.msra.mxu0 0.0
        %219 = vmatprep.subr.mxu0 0.0
        %220 = vmatpush1.msra.mxu0 0.0
        %221 = vmatprep.subr.mxu0 0.0
        %222 = vmatpush1.msra.mxu0 0.0
        %223 = vmatprep.subr.mxu0 0.0
        %224 = vmatpush1.msra.mxu0 0.0
        %225 = vmatprep.subr.mxu0 0.0
        %226 = vmatpush1.msra.mxu0 0.0
        %227 = vmatprep.subr.mxu0 0.0
        %228 = vmatpush1.msra.mxu0 0.0
        %229 = vmatprep.subr.mxu0 0.0
        %230 = vmatpush1.msra.mxu0 0.0
        %231 = vmatprep.subr.mxu0 0.0
        %232 = vmatpush1.msra.mxu0 0.0
        %233 = vmatprep.subr.mxu0 0.0
        %234 = vmatpush1.msra.mxu0 0.0
        %235 = vmatprep.subr.mxu0 0.0
        %236 = vmatpush1.msra.mxu0 0.0
        %237 = vmatprep.subr.mxu0 0.0
        %238 = vmatpush1.msra.mxu0 0.0
        %239 = vmatprep.subr.mxu0 0.0
        %240 = vmatpush1.msra.mxu0 0.0
        %241 = vmatprep.subr.mxu0 0.0
        %242 = vmatpush1.msra.mxu0 0.0
        %243 = vmatprep.subr.mxu0 0.0
        %244 = vmatpush1.msra.mxu0 0.0
        %245 = vmatprep.subr.mxu0 0.0
        %246 = vmatpush1.msra.mxu0 0.0
        %247 = vmatprep.subr.mxu0 0.0
        %248 = vmatpush1.msra.mxu0 0.0
        %249 = vmatprep.subr.mxu0 0.0
        %250 = vmatpush1.msra.mxu0 0.0
        %251 = vmatprep.subr.mxu0 0.0
        %252 = vmatpush1.msra.mxu0 0.0
        %253 = vmatprep.subr.mxu0 0.0
        %254 = vmatpush1.msra.mxu0 0.0
        %255 = vmatprep.subr.mxu0 0.0
        %256 = vmatpush1.msra.mxu0 0.0
        %257 = vmatprep.subr.mxu0 0.0
        %258 = vmatpush1.msra.mxu0 0.0
        %259 = vmatprep.subr.mxu0 0.0
        %260 = vmatpush1.msra.mxu0 0.0
        %261 = vmatprep.subr.mxu0 0.0
        %262 = vmatpush1.msra.mxu0 0.0
        %263 = vmatprep.subr.mxu0 0.0
        %264 = vmatpush1.msra.mxu0 0.0
        %265 = vmatprep.subr.mxu0 0.0
        %266 = vmatpush1.msra.mxu0 0.0
        %267 = vmatprep.subr.mxu0 0.0
        %268 = vmatpush1.msra.mxu0 0.0
        %269 = vmatprep.subr.mxu0 0.0
        %270 = vmatpush1.msra.mxu0 0.0
        %271 = vmatprep.mubr.f32.mxu0 0.0
        %272 = vmatmul.mubr.f32.gmra.mrb[0].mxu0 %v198
        %v273 = vpop.f32.mrb[0].mxu0
        %v274 = vadd.f32 0.0, %v273
        %v275 = vpop.f32.mrb[0].mxu0
        %v276 = vadd.f32 0.0, %v275
        %277 = vdwg.mxu0
        %278 = vmatprep.subr.mxu0 0.0
        %279 = vmatpush1.msra.mxu0 %v205
        %280 = vmatprep.subr.mxu0 0.0
        %281 = vmatpush1.msra.mxu0 0.0
        %282 = vmatprep.subr.mxu0 0.0
        %283 = vmatpush1.msra.mxu0 0.0
        %284 = vmatprep.subr.mxu0 0.0
        %285 = vmatpush1.msra.mxu0 0.0
        %286 = vmatprep.subr.mxu0 0.0
        %287 = vmatpush1.msra.mxu0 0.0
        %288 = vmatprep.subr.mxu0 0.0
        %289 = vmatpush1.msra.mxu0 0.0
        %290 = vmatprep.subr.mxu0 0.0
        %291 = vmatpush1.msra.mxu0 0.0
        %292 = vmatprep.subr.mxu0 0.0
        %293 = vmatpush1.msra.mxu0 0.0
        %294 = vmatprep.subr.mxu0 0.0
        %295 = vmatpush1.msra.mxu0 0.0
        %296 = vmatprep.subr.mxu0 0.0
        %297 = vmatpush1.msra.mxu0 0.0
        %298 = vmatprep.subr.mxu0 0.0
        %299 = vmatpush1.msra.mxu0 0.0
        %300 = vmatprep.subr.mxu0 0.0
        %301 = vmatpush1.msra.mxu0 0.0
        %302 = vmatprep.subr.mxu0 0.0
        %303 = vmatpush1.msra.mxu0 0.0
        %304 = vmatprep.subr.mxu0 0.0
        %305 = vmatpush1.msra.mxu0 0.0
        %306 = vmatprep.subr.mxu0 0.0
        %307 = vmatpush1.msra.mxu0 0.0
        %308 = vmatprep.subr.mxu0 0.0
        %309 = vmatpush1.msra.mxu0 0.0
        %310 = vmatprep.subr.mxu0 0.0
        %311 = vmatpush1.msra.mxu0 0.0
        %312 = vmatprep.subr.mxu0 0.0
        %313 = vmatpush1.msra.mxu0 0.0
        %314 = vmatprep.subr.mxu0 0.0
        %315 = vmatpush1.msra.mxu0 0.0
        %316 = vmatprep.subr.mxu0 0.0
        %317 = vmatpush1.msra.mxu0 0.0
        %318 = vmatprep.subr.mxu0 0.0
        %319 = vmatpush1.msra.mxu0 0.0
        %320 = vmatprep.subr.mxu0 0.0
        %321 = vmatpush1.msra.mxu0 0.0
        %322 = vmatprep.subr.mxu0 0.0
        %323 = vmatpush1.msra.mxu0 0.0
        %324 = vmatprep.subr.mxu0 0.0
        %325 = vmatpush1.msra.mxu0 0.0
        %326 = vmatprep.subr.mxu0 0.0
        %327 = vmatpush1.msra.mxu0 0.0
        %328 = vmatprep.subr.mxu0 0.0
        %329 = vmatpush1.msra.mxu0 0.0
        %330 = vmatprep.subr.mxu0 0.0
        %331 = vmatpush1.msra.mxu0 0.0
        %332 = vmatprep.subr.mxu0 0.0
        %333 = vmatpush1.msra.mxu0 0.0
        %334 = vmatprep.subr.mxu0 0.0
        %335 = vmatpush1.msra.mxu0 0.0
        %336 = vmatprep.subr.mxu0 0.0
        %337 = vmatpush1.msra.mxu0 0.0
        %338 = vmatprep.subr.mxu0 0.0
        %339 = vmatpush1.msra.mxu0 0.0
        %340 = vmatprep.subr.mxu0 0.0
        %341 = vmatpush1.msra.mxu0 0.0
        %342 = vmatprep.mubr.f32.mxu0 0.0
        %343 = vmatmul.mubr.f32.gmra.mrb[0].mxu0 %v198
        %v344 = vpop.f32.mrb[0].mxu0
        %v345 = vadd.f32 0.0, %v344
        %v346 = vpop.f32.mrb[0].mxu0
        %347 = vdwg.mxu0
        %v349 = vsel %vm196, %v171, 0
        %v351 = vsel %vm200, %v169, 0
        %v353 = vsel %vm200, %v182, 0
        %v355 = vsel %vm200, %v170, 0
        %357 = vmatprep.subr.mxu0 %v353
        %358 = vmatpush1.msra.mxu0 %v351
        %359 = vmatprep.subr.mxu0 0.0
        %360 = vmatpush1.msra.mxu0 0.0
        %361 = vmatprep.subr.mxu0 0.0
        %362 = vmatpush1.msra.mxu0 0.0
        %363 = vmatprep.subr.mxu0 0.0
        %364 = vmatpush1.msra.mxu0 0.0
        %365 = vmatprep.subr.mxu0 0.0
        %366 = vmatpush1.msra.mxu0 0.0
        %367 = vmatprep.subr.mxu0 0.0
        %368 = vmatpush1.msra.mxu0 0.0
        %369 = vmatprep.subr.mxu0 0.0
        %370 = vmatpush1.msra.mxu0 0.0
        %371 = vmatprep.subr.mxu0 0.0
        %372 = vmatpush1.msra.mxu0 0.0
        %373 = vmatprep.subr.mxu0 0.0
        %374 = vmatpush1.msra.mxu0 0.0
        %375 = vmatprep.subr.mxu0 0.0
        %376 = vmatpush1.msra.mxu0 0.0
        %377 = vmatprep.subr.mxu0 0.0
        %378 = vmatpush1.msra.mxu0 0.0
        %379 = vmatprep.subr.mxu0 0.0
        %380 = vmatpush1.msra.mxu0 0.0
        %381 = vmatprep.subr.mxu0 0.0
        %382 = vmatpush1.msra.mxu0 0.0
        %383 = vmatprep.subr.mxu0 0.0
        %384 = vmatpush1.msra.mxu0 0.0
        %385 = vmatprep.subr.mxu0 0.0
        %386 = vmatpush1.msra.mxu0 0.0
        %387 = vmatprep.subr.mxu0 0.0
        %388 = vmatpush1.msra.mxu0 0.0
        %389 = vmatprep.subr.mxu0 0.0
        %390 = vmatpush1.msra.mxu0 0.0
        %391 = vmatprep.subr.mxu0 0.0
        %392 = vmatpush1.msra.mxu0 0.0
        %393 = vmatprep.subr.mxu0 0.0
        %394 = vmatpush1.msra.mxu0 0.0
        %395 = vmatprep.subr.mxu0 0.0
        %396 = vmatpush1.msra.mxu0 0.0
        %397 = vmatprep.subr.mxu0 0.0
        %398 = vmatpush1.msra.mxu0 0.0
        %399 = vmatprep.subr.mxu0 0.0
        %400 = vmatpush1.msra.mxu0 0.0
        %401 = vmatprep.subr.mxu0 0.0
        %402 = vmatpush1.msra.mxu0 0.0
        %403 = vmatprep.subr.mxu0 0.0
        %404 = vmatpush1.msra.mxu0 0.0
        %405 = vmatprep.subr.mxu0 0.0
        %406 = vmatpush1.msra.mxu0 0.0
        %407 = vmatprep.subr.mxu0 0.0
        %408 = vmatpush1.msra.mxu0 0.0
        %409 = vmatprep.subr.mxu0 0.0
        %410 = vmatpush1.msra.mxu0 0.0
        %411 = vmatprep.subr.mxu0 0.0
        %412 = vmatpush1.msra.mxu0 0.0
        %413 = vmatprep.subr.mxu0 0.0
        %414 = vmatpush1.msra.mxu0 0.0
        %415 = vmatprep.subr.mxu0 0.0
        %416 = vmatpush1.msra.mxu0 0.0
        %417 = vmatprep.subr.mxu0 0.0
        %418 = vmatpush1.msra.mxu0 0.0
        %419 = vmatprep.subr.mxu0 0.0
        %420 = vmatpush1.msra.mxu0 0.0
        %421 = vmatprep.mubr.f32.mxu0 0.0
        %422 = vmatmul.mubr.f32.gmra.mrb[0].mxu0 %v349
        %v423 = vpop.f32.mrb[0].mxu0
        %v424 = vadd.f32 %v274, %v423
        %v425 = vpop.f32.mrb[0].mxu0
        %v426 = vadd.f32 %v276, %v425
        %427 = vdwg.mxu0
        %428 = vmatprep.subr.mxu0 0.0
        %429 = vmatpush1.msra.mxu0 %v355
        %430 = vmatprep.subr.mxu0 0.0
        %431 = vmatpush1.msra.mxu0 0.0
        %432 = vmatprep.subr.mxu0 0.0
        %433 = vmatpush1.msra.mxu0 0.0
        %434 = vmatprep.subr.mxu0 0.0
        %435 = vmatpush1.msra.mxu0 0.0
        %436 = vmatprep.subr.mxu0 0.0
        %437 = vmatpush1.msra.mxu0 0.0
        %438 = vmatprep.subr.mxu0 0.0
        %439 = vmatpush1.msra.mxu0 0.0
        %440 = vmatprep.subr.mxu0 0.0
        %441 = vmatpush1.msra.mxu0 0.0
        %442 = vmatprep.subr.mxu0 0.0
        %443 = vmatpush1.msra.mxu0 0.0
        %444 = vmatprep.subr.mxu0 0.0
        %445 = vmatpush1.msra.mxu0 0.0
        %446 = vmatprep.subr.mxu0 0.0
        %447 = vmatpush1.msra.mxu0 0.0
        %448 = vmatprep.subr.mxu0 0.0
        %449 = vmatpush1.msra.mxu0 0.0
        %450 = vmatprep.subr.mxu0 0.0
        %451 = vmatpush1.msra.mxu0 0.0
        %452 = vmatprep.subr.mxu0 0.0
        %453 = vmatpush1.msra.mxu0 0.0
        %454 = vmatprep.subr.mxu0 0.0
        %455 = vmatpush1.msra.mxu0 0.0
        %456 = vmatprep.subr.mxu0 0.0
        %457 = vmatpush1.msra.mxu0 0.0
        %458 = vmatprep.subr.mxu0 0.0
        %459 = vmatpush1.msra.mxu0 0.0
        %460 = vmatprep.subr.mxu0 0.0
        %461 = vmatpush1.msra.mxu0 0.0
        %462 = vmatprep.subr.mxu0 0.0
        %463 = vmatpush1.msra.mxu0 0.0
        %464 = vmatprep.subr.mxu0 0.0
        %465 = vmatpush1.msra.mxu0 0.0
        %466 = vmatprep.subr.mxu0 0.0
        %467 = vmatpush1.msra.mxu0 0.0
        %468 = vmatprep.subr.mxu0 0.0
        %469 = vmatpush1.msra.mxu0 0.0
        %470 = vmatprep.subr.mxu0 0.0
        %471 = vmatpush1.msra.mxu0 0.0
        %472 = vmatprep.subr.mxu0 0.0
        %473 = vmatpush1.msra.mxu0 0.0
        %474 = vmatprep.subr.mxu0 0.0
        %475 = vmatpush1.msra.mxu0 0.0
        %476 = vmatprep.subr.mxu0 0.0
        %477 = vmatpush1.msra.mxu0 0.0
        %478 = vmatprep.subr.mxu0 0.0
        %479 = vmatpush1.msra.mxu0 0.0
        %480 = vmatprep.subr.mxu0 0.0
        %481 = vmatpush1.msra.mxu0 0.0
        %482 = vmatprep.subr.mxu0 0.0
        %483 = vmatpush1.msra.mxu0 0.0
        %484 = vmatprep.subr.mxu0 0.0
        %485 = vmatpush1.msra.mxu0 0.0
        %486 = vmatprep.subr.mxu0 0.0
        %487 = vmatpush1.msra.mxu0 0.0
        %488 = vmatprep.subr.mxu0 0.0
        %489 = vmatpush1.msra.mxu0 0.0
        %490 = vmatprep.subr.mxu0 0.0
        %491 = vmatpush1.msra.mxu0 0.0
        %492 = vmatprep.mubr.f32.mxu0 0.0
        %493 = vmatmul.mubr.f32.gmra.mrb[0].mxu0 %v349
        %v494 = vpop.f32.mrb[0].mxu0
        %v495 = vadd.f32 %v345, %v494
        %v496 = vpop.f32.mrb[0].mxu0
        %497 = vdwg.mxu0
        %498 = vrot.lane.b32.xlu0 %v169, 126
        %v499 = vpop.permute.xlu0 %498
        %500 = vrot.lane.b32.xlu0 %v182, 126
        %v501 = vpop.permute.xlu0 %500
        %502 = vrot.lane.b32.xlu0 %v170, 126
        %v503 = vpop.permute.xlu0 %502
        %504 = vrot.lane.b32.xlu0 %v183, 126
        %v505 = vpop.permute.xlu0 %504
        %vm506 = vcmask 1031168
        %v507 = vsel %vm506, %v499, %v501
        %v508 = vsel %vm506, %v501, %v503
        %v509 = vsel %vm506, %v503, %v505
        %v511 = vsel %vm196, %v173, 0
        %v513 = vsel %vm200, %v507, 0
        %v515 = vsel %vm200, %v508, 0
        %v517 = vsel %vm200, %v509, 0
        %519 = vmatprep.subr.mxu0 %v515
        %520 = vmatpush1.msra.mxu0 %v513
        %521 = vmatprep.subr.mxu0 0.0
        %522 = vmatpush1.msra.mxu0 0.0
        %523 = vmatprep.subr.mxu0 0.0
        %524 = vmatpush1.msra.mxu0 0.0
        %525 = vmatprep.subr.mxu0 0.0
        %526 = vmatpush1.msra.mxu0 0.0
        %527 = vmatprep.subr.mxu0 0.0
        %528 = vmatpush1.msra.mxu0 0.0
        %529 = vmatprep.subr.mxu0 0.0
        %530 = vmatpush1.msra.mxu0 0.0
        %531 = vmatprep.subr.mxu0 0.0
        %532 = vmatpush1.msra.mxu0 0.0
        %533 = vmatprep.subr.mxu0 0.0
        %534 = vmatpush1.msra.mxu0 0.0
        %535 = vmatprep.subr.mxu0 0.0
        %536 = vmatpush1.msra.mxu0 0.0
        %537 = vmatprep.subr.mxu0 0.0
        %538 = vmatpush1.msra.mxu0 0.0
        %539 = vmatprep.subr.mxu0 0.0
        %540 = vmatpush1.msra.mxu0 0.0
        %541 = vmatprep.subr.mxu0 0.0
        %542 = vmatpush1.msra.mxu0 0.0
        %543 = vmatprep.subr.mxu0 0.0
        %544 = vmatpush1.msra.mxu0 0.0
        %545 = vmatprep.subr.mxu0 0.0
        %546 = vmatpush1.msra.mxu0 0.0
        %547 = vmatprep.subr.mxu0 0.0
        %548 = vmatpush1.msra.mxu0 0.0
        %549 = vmatprep.subr.mxu0 0.0
        %550 = vmatpush1.msra.mxu0 0.0
        %551 = vmatprep.subr.mxu0 0.0
        %552 = vmatpush1.msra.mxu0 0.0
        %553 = vmatprep.subr.mxu0 0.0
        %554 = vmatpush1.msra.mxu0 0.0
        %555 = vmatprep.subr.mxu0 0.0
        %556 = vmatpush1.msra.mxu0 0.0
        %557 = vmatprep.subr.mxu0 0.0
        %558 = vmatpush1.msra.mxu0 0.0
        %559 = vmatprep.subr.mxu0 0.0
        %560 = vmatpush1.msra.mxu0 0.0
        %561 = vmatprep.subr.mxu0 0.0
        %562 = vmatpush1.msra.mxu0 0.0
        %563 = vmatprep.subr.mxu0 0.0
        %564 = vmatpush1.msra.mxu0 0.0
        %565 = vmatprep.subr.mxu0 0.0
        %566 = vmatpush1.msra.mxu0 0.0
        %567 = vmatprep.subr.mxu0 0.0
        %568 = vmatpush1.msra.mxu0 0.0
        %569 = vmatprep.subr.mxu0 0.0
        %570 = vmatpush1.msra.mxu0 0.0
        %571 = vmatprep.subr.mxu0 0.0
        %572 = vmatpush1.msra.mxu0 0.0
        %573 = vmatprep.subr.mxu0 0.0
        %574 = vmatpush1.msra.mxu0 0.0
        %575 = vmatprep.subr.mxu0 0.0
        %576 = vmatpush1.msra.mxu0 0.0
        %577 = vmatprep.subr.mxu0 0.0
        %578 = vmatpush1.msra.mxu0 0.0
        %579 = vmatprep.subr.mxu0 0.0
        %580 = vmatpush1.msra.mxu0 0.0
        %581 = vmatprep.subr.mxu0 0.0
        %582 = vmatpush1.msra.mxu0 0.0
        %583 = vmatprep.mubr.f32.mxu0 0.0
        %584 = vmatmul.mubr.f32.gmra.mrb[0].mxu0 %v511
        %v585 = vpop.f32.mrb[0].mxu0
        %v586 = vadd.f32 0.0, %v585
        %v587 = vpop.f32.mrb[0].mxu0
        %v588 = vadd.f32 0.0, %v587
        %589 = vdwg.mxu0
        %590 = vmatprep.subr.mxu0 0.0
        %591 = vmatpush1.msra.mxu0 %v517
        %592 = vmatprep.subr.mxu0 0.0
        %593 = vmatpush1.msra.mxu0 0.0
        %594 = vmatprep.subr.mxu0 0.0
        %595 = vmatpush1.msra.mxu0 0.0
        %596 = vmatprep.subr.mxu0 0.0
        %597 = vmatpush1.msra.mxu0 0.0
        %598 = vmatprep.subr.mxu0 0.0
        %599 = vmatpush1.msra.mxu0 0.0
        %600 = vmatprep.subr.mxu0 0.0
        %601 = vmatpush1.msra.mxu0 0.0
        %602 = vmatprep.subr.mxu0 0.0
        %603 = vmatpush1.msra.mxu0 0.0
        %604 = vmatprep.subr.mxu0 0.0
        %605 = vmatpush1.msra.mxu0 0.0
        %606 = vmatprep.subr.mxu0 0.0
        %607 = vmatpush1.msra.mxu0 0.0
        %608 = vmatprep.subr.mxu0 0.0
        %609 = vmatpush1.msra.mxu0 0.0
        %610 = vmatprep.subr.mxu0 0.0
        %611 = vmatpush1.msra.mxu0 0.0
        %612 = vmatprep.subr.mxu0 0.0
        %613 = vmatpush1.msra.mxu0 0.0
        %614 = vmatprep.subr.mxu0 0.0
        %615 = vmatpush1.msra.mxu0 0.0
        %616 = vmatprep.subr.mxu0 0.0
        %617 = vmatpush1.msra.mxu0 0.0
        %618 = vmatprep.subr.mxu0 0.0
        %619 = vmatpush1.msra.mxu0 0.0
        %620 = vmatprep.subr.mxu0 0.0
        %621 = vmatpush1.msra.mxu0 0.0
        %622 = vmatprep.subr.mxu0 0.0
        %623 = vmatpush1.msra.mxu0 0.0
        %624 = vmatprep.subr.mxu0 0.0
        %625 = vmatpush1.msra.mxu0 0.0
        %626 = vmatprep.subr.mxu0 0.0
        %627 = vmatpush1.msra.mxu0 0.0
        %628 = vmatprep.subr.mxu0 0.0
        %629 = vmatpush1.msra.mxu0 0.0
        %630 = vmatprep.subr.mxu0 0.0
        %631 = vmatpush1.msra.mxu0 0.0
        %632 = vmatprep.subr.mxu0 0.0
        %633 = vmatpush1.msra.mxu0 0.0
        %634 = vmatprep.subr.mxu0 0.0
        %635 = vmatpush1.msra.mxu0 0.0
        %636 = vmatprep.subr.mxu0 0.0
        %637 = vmatpush1.msra.mxu0 0.0
        %638 = vmatprep.subr.mxu0 0.0
        %639 = vmatpush1.msra.mxu0 0.0
        %640 = vmatprep.subr.mxu0 0.0
        %641 = vmatpush1.msra.mxu0 0.0
        %642 = vmatprep.subr.mxu0 0.0
        %643 = vmatpush1.msra.mxu0 0.0
        %644 = vmatprep.subr.mxu0 0.0
        %645 = vmatpush1.msra.mxu0 0.0
        %646 = vmatprep.subr.mxu0 0.0
        %647 = vmatpush1.msra.mxu0 0.0
        %648 = vmatprep.subr.mxu0 0.0
        %649 = vmatpush1.msra.mxu0 0.0
        %650 = vmatprep.subr.mxu0 0.0
        %651 = vmatpush1.msra.mxu0 0.0
        %652 = vmatprep.subr.mxu0 0.0
        %653 = vmatpush1.msra.mxu0 0.0
        %654 = vmatprep.mubr.f32.mxu0 0.0
        %655 = vmatmul.mubr.f32.gmra.mrb[0].mxu0 %v511
        %v656 = vpop.f32.mrb[0].mxu0
        %v657 = vadd.f32 0.0, %v656
        %v658 = vpop.f32.mrb[0].mxu0
        %659 = vdwg.mxu0
        %v660 = vadd.f32 %v424, %v586
        %v661 = vadd.f32 %v426, %v588
        %v662 = vadd.f32 %v495, %v657
        %663 = vrot.lane.b32.xlu0 %v169, 110
        %v664 = vpop.permute.xlu0 %663
        %665 = vrot.lane.b32.xlu0 %v182, 110
        %v666 = vpop.permute.xlu0 %665
        %667 = vrot.lane.b32.xlu0 %v170, 110
        %v668 = vpop.permute.xlu0 %667
        %669 = vrot.lane.b32.xlu0 %v183, 110
        %v670 = vpop.permute.xlu0 %669
        %vm671 = vcmask 900096
        %v672 = vsel %vm671, %v664, %v666
        %v673 = vsel %vm671, %v666, %v668
        %v674 = vsel %vm671, %v668, %v670
        %v676 = vsel %vm196, %v174, 0
        %v678 = vsel %vm200, %v672, 0
        %v680 = vsel %vm200, %v673, 0
        %v682 = vsel %vm200, %v674, 0
        %684 = vmatprep.subr.mxu0 %v680
        %685 = vmatpush1.msra.mxu0 %v678
        %686 = vmatprep.subr.mxu0 0.0
        %687 = vmatpush1.msra.mxu0 0.0
        %688 = vmatprep.subr.mxu0 0.0
        %689 = vmatpush1.msra.mxu0 0.0
        %690 = vmatprep.subr.mxu0 0.0
        %691 = vmatpush1.msra.mxu0 0.0
        %692 = vmatprep.subr.mxu0 0.0
        %693 = vmatpush1.msra.mxu0 0.0
        %694 = vmatprep.subr.mxu0 0.0
        %695 = vmatpush1.msra.mxu0 0.0
        %696 = vmatprep.subr.mxu0 0.0
        %697 = vmatpush1.msra.mxu0 0.0
        %698 = vmatprep.subr.mxu0 0.0
        %699 = vmatpush1.msra.mxu0 0.0
        %700 = vmatprep.subr.mxu0 0.0
        %701 = vmatpush1.msra.mxu0 0.0
        %702 = vmatprep.subr.mxu0 0.0
        %703 = vmatpush1.msra.mxu0 0.0
        %704 = vmatprep.subr.mxu0 0.0
        %705 = vmatpush1.msra.mxu0 0.0
        %706 = vmatprep.subr.mxu0 0.0
        %707 = vmatpush1.msra.mxu0 0.0
        %708 = vmatprep.subr.mxu0 0.0
        %709 = vmatpush1.msra.mxu0 0.0
        %710 = vmatprep.subr.mxu0 0.0
        %711 = vmatpush1.msra.mxu0 0.0
        %712 = vmatprep.subr.mxu0 0.0
        %713 = vmatpush1.msra.mxu0 0.0
        %714 = vmatprep.subr.mxu0 0.0
        %715 = vmatpush1.msra.mxu0 0.0
        %716 = vmatprep.subr.mxu0 0.0
        %717 = vmatpush1.msra.mxu0 0.0
        %718 = vmatprep.subr.mxu0 0.0
        %719 = vmatpush1.msra.mxu0 0.0
        %720 = vmatprep.subr.mxu0 0.0
        %721 = vmatpush1.msra.mxu0 0.0
        %722 = vmatprep.subr.mxu0 0.0
        %723 = vmatpush1.msra.mxu0 0.0
        %724 = vmatprep.subr.mxu0 0.0
        %725 = vmatpush1.msra.mxu0 0.0
        %726 = vmatprep.subr.mxu0 0.0
        %727 = vmatpush1.msra.mxu0 0.0
        %728 = vmatprep.subr.mxu0 0.0
        %729 = vmatpush1.msra.mxu0 0.0
        %730 = vmatprep.subr.mxu0 0.0
        %731 = vmatpush1.msra.mxu0 0.0
        %732 = vmatprep.subr.mxu0 0.0
        %733 = vmatpush1.msra.mxu0 0.0
        %734 = vmatprep.subr.mxu0 0.0
        %735 = vmatpush1.msra.mxu0 0.0
        %736 = vmatprep.subr.mxu0 0.0
        %737 = vmatpush1.msra.mxu0 0.0
        %738 = vmatprep.subr.mxu0 0.0
        %739 = vmatpush1.msra.mxu0 0.0
        %740 = vmatprep.subr.mxu0 0.0
        %741 = vmatpush1.msra.mxu0 0.0
        %742 = vmatprep.subr.mxu0 0.0
        %743 = vmatpush1.msra.mxu0 0.0
        %744 = vmatprep.subr.mxu0 0.0
        %745 = vmatpush1.msra.mxu0 0.0
        %746 = vmatprep.subr.mxu0 0.0
        %747 = vmatpush1.msra.mxu0 0.0
        %748 = vmatprep.mubr.f32.mxu0 0.0
        %749 = vmatmul.mubr.f32.gmra.mrb[0].mxu0 %v676
        %v750 = vpop.f32.mrb[0].mxu0
        %v751 = vadd.f32 0.0, %v750
        %v752 = vpop.f32.mrb[0].mxu0
        %v753 = vadd.f32 0.0, %v752
        %754 = vdwg.mxu0
        %755 = vmatprep.subr.mxu0 0.0
        %756 = vmatpush1.msra.mxu0 %v682
        %757 = vmatprep.subr.mxu0 0.0
        %758 = vmatpush1.msra.mxu0 0.0
        %759 = vmatprep.subr.mxu0 0.0
        %760 = vmatpush1.msra.mxu0 0.0
        %761 = vmatprep.subr.mxu0 0.0
        %762 = vmatpush1.msra.mxu0 0.0
        %763 = vmatprep.subr.mxu0 0.0
        %764 = vmatpush1.msra.mxu0 0.0
        %765 = vmatprep.subr.mxu0 0.0
        %766 = vmatpush1.msra.mxu0 0.0
        %767 = vmatprep.subr.mxu0 0.0
        %768 = vmatpush1.msra.mxu0 0.0
        %769 = vmatprep.subr.mxu0 0.0
        %770 = vmatpush1.msra.mxu0 0.0
        %771 = vmatprep.subr.mxu0 0.0
        %772 = vmatpush1.msra.mxu0 0.0
        %773 = vmatprep.subr.mxu0 0.0
        %774 = vmatpush1.msra.mxu0 0.0
        %775 = vmatprep.subr.mxu0 0.0
        %776 = vmatpush1.msra.mxu0 0.0
        %777 = vmatprep.subr.mxu0 0.0
        %778 = vmatpush1.msra.mxu0 0.0
        %779 = vmatprep.subr.mxu0 0.0
        %780 = vmatpush1.msra.mxu0 0.0
        %781 = vmatprep.subr.mxu0 0.0
        %782 = vmatpush1.msra.mxu0 0.0
        %783 = vmatprep.subr.mxu0 0.0
        %784 = vmatpush1.msra.mxu0 0.0
        %785 = vmatprep.subr.mxu0 0.0
        %786 = vmatpush1.msra.mxu0 0.0
        %787 = vmatprep.subr.mxu0 0.0
        %788 = vmatpush1.msra.mxu0 0.0
        %789 = vmatprep.subr.mxu0 0.0
        %790 = vmatpush1.msra.mxu0 0.0
        %791 = vmatprep.subr.mxu0 0.0
        %792 = vmatpush1.msra.mxu0 0.0
        %793 = vmatprep.subr.mxu0 0.0
        %794 = vmatpush1.msra.mxu0 0.0
        %795 = vmatprep.subr.mxu0 0.0
        %796 = vmatpush1.msra.mxu0 0.0
        %797 = vmatprep.subr.mxu0 0.0
        %798 = vmatpush1.msra.mxu0 0.0
        %799 = vmatprep.subr.mxu0 0.0
        %800 = vmatpush1.msra.mxu0 0.0
        %801 = vmatprep.subr.mxu0 0.0
        %802 = vmatpush1.msra.mxu0 0.0
        %803 = vmatprep.subr.mxu0 0.0
        %804 = vmatpush1.msra.mxu0 0.0
        %805 = vmatprep.subr.mxu0 0.0
        %806 = vmatpush1.msra.mxu0 0.0
        %807 = vmatprep.subr.mxu0 0.0
        %808 = vmatpush1.msra.mxu0 0.0
        %809 = vmatprep.subr.mxu0 0.0
        %810 = vmatpush1.msra.mxu0 0.0
        %811 = vmatprep.subr.mxu0 0.0
        %812 = vmatpush1.msra.mxu0 0.0
        %813 = vmatprep.subr.mxu0 0.0
        %814 = vmatpush1.msra.mxu0 0.0
        %815 = vmatprep.subr.mxu0 0.0
        %816 = vmatpush1.msra.mxu0 0.0
        %817 = vmatprep.subr.mxu0 0.0
        %818 = vmatpush1.msra.mxu0 0.0
        %819 = vmatprep.mubr.f32.mxu0 0.0
        %820 = vmatmul.mubr.f32.gmra.mrb[0].mxu0 %v676
        %v821 = vpop.f32.mrb[0].mxu0
        %v822 = vadd.f32 0.0, %v821
        %v823 = vpop.f32.mrb[0].mxu0
        %824 = vdwg.mxu0
        %v825 = vadd.f32 %v660, %v751
        %v826 = vadd.f32 %v661, %v753
        %v827 = vadd.f32 %v662, %v822
        %828 = vrot.lane.b32.xlu0 %v169, 109
        %v829 = vpop.permute.xlu0 %828
        %830 = vrot.lane.b32.xlu0 %v182, 109
        %v831 = vpop.permute.xlu0 %830
        %832 = vrot.lane.b32.xlu0 %v170, 109
        %v833 = vpop.permute.xlu0 %832
        %834 = vrot.lane.b32.xlu0 %v183, 109
        %v835 = vpop.permute.xlu0 %834
        %vm836 = vcmask 891904
        %v837 = vsel %vm836, %v829, %v831
        %v838 = vsel %vm836, %v831, %v833
        %v839 = vsel %vm836, %v833, %v835
        %v841 = vsel %vm196, %v175, 0
        %v843 = vsel %vm200, %v837, 0
        %v845 = vsel %vm200, %v838, 0
        %v847 = vsel %vm200, %v839, 0
        %849 = vmatprep.subr.mxu0 %v845
        %850 = vmatpush1.msra.mxu0 %v843
        %851 = vmatprep.subr.mxu0 0.0
        %852 = vmatpush1.msra.mxu0 0.0
        %853 = vmatprep.subr.mxu0 0.0
        %854 = vmatpush1.msra.mxu0 0.0
        %855 = vmatprep.subr.mxu0 0.0
        %856 = vmatpush1.msra.mxu0 0.0
        %857 = vmatprep.subr.mxu0 0.0
        %858 = vmatpush1.msra.mxu0 0.0
        %859 = vmatprep.subr.mxu0 0.0
        %860 = vmatpush1.msra.mxu0 0.0
        %861 = vmatprep.subr.mxu0 0.0
        %862 = vmatpush1.msra.mxu0 0.0
        %863 = vmatprep.subr.mxu0 0.0
        %864 = vmatpush1.msra.mxu0 0.0
        %865 = vmatprep.subr.mxu0 0.0
        %866 = vmatpush1.msra.mxu0 0.0
        %867 = vmatprep.subr.mxu0 0.0
        %868 = vmatpush1.msra.mxu0 0.0
        %869 = vmatprep.subr.mxu0 0.0
        %870 = vmatpush1.msra.mxu0 0.0
        %871 = vmatprep.subr.mxu0 0.0
        %872 = vmatpush1.msra.mxu0 0.0
        %873 = vmatprep.subr.mxu0 0.0
        %874 = vmatpush1.msra.mxu0 0.0
        %875 = vmatprep.subr.mxu0 0.0
        %876 = vmatpush1.msra.mxu0 0.0
        %877 = vmatprep.subr.mxu0 0.0
        %878 = vmatpush1.msra.mxu0 0.0
        %879 = vmatprep.subr.mxu0 0.0
        %880 = vmatpush1.msra.mxu0 0.0
        %881 = vmatprep.subr.mxu0 0.0
        %882 = vmatpush1.msra.mxu0 0.0
        %883 = vmatprep.subr.mxu0 0.0
        %884 = vmatpush1.msra.mxu0 0.0
        %885 = vmatprep.subr.mxu0 0.0
        %886 = vmatpush1.msra.mxu0 0.0
        %887 = vmatprep.subr.mxu0 0.0
        %888 = vmatpush1.msra.mxu0 0.0
        %889 = vmatprep.subr.mxu0 0.0
        %890 = vmatpush1.msra.mxu0 0.0
        %891 = vmatprep.subr.mxu0 0.0
        %892 = vmatpush1.msra.mxu0 0.0
        %893 = vmatprep.subr.mxu0 0.0
        %894 = vmatpush1.msra.mxu0 0.0
        %895 = vmatprep.subr.mxu0 0.0
        %896 = vmatpush1.msra.mxu0 0.0
        %897 = vmatprep.subr.mxu0 0.0
        %898 = vmatpush1.msra.mxu0 0.0
        %899 = vmatprep.subr.mxu0 0.0
        %900 = vmatpush1.msra.mxu0 0.0
        %901 = vmatprep.subr.mxu0 0.0
        %902 = vmatpush1.msra.mxu0 0.0
        %903 = vmatprep.subr.mxu0 0.0
        %904 = vmatpush1.msra.mxu0 0.0
        %905 = vmatprep.subr.mxu0 0.0
        %906 = vmatpush1.msra.mxu0 0.0
        %907 = vmatprep.subr.mxu0 0.0
        %908 = vmatpush1.msra.mxu0 0.0
        %909 = vmatprep.subr.mxu0 0.0
        %910 = vmatpush1.msra.mxu0 0.0
        %911 = vmatprep.subr.mxu0 0.0
        %912 = vmatpush1.msra.mxu0 0.0
        %913 = vmatprep.mubr.f32.mxu0 0.0
        %914 = vmatmul.mubr.f32.gmra.mrb[0].mxu0 %v841
        %v915 = vpop.f32.mrb[0].mxu0
        %v916 = vadd.f32 0.0, %v915
        %v917 = vpop.f32.mrb[0].mxu0
        %v918 = vadd.f32 0.0, %v917
        %919 = vdwg.mxu0
        %920 = vmatprep.subr.mxu0 0.0
        %921 = vmatpush1.msra.mxu0 %v847
        %922 = vmatprep.subr.mxu0 0.0
        %923 = vmatpush1.msra.mxu0 0.0
        %924 = vmatprep.subr.mxu0 0.0
        %925 = vmatpush1.msra.mxu0 0.0
        %926 = vmatprep.subr.mxu0 0.0
        %927 = vmatpush1.msra.mxu0 0.0
        %928 = vmatprep.subr.mxu0 0.0
        %929 = vmatpush1.msra.mxu0 0.0
        %930 = vmatprep.subr.mxu0 0.0
        %931 = vmatpush1.msra.mxu0 0.0
        %932 = vmatprep.subr.mxu0 0.0
        %933 = vmatpush1.msra.mxu0 0.0
        %934 = vmatprep.subr.mxu0 0.0
        %935 = vmatpush1.msra.mxu0 0.0
        %936 = vmatprep.subr.mxu0 0.0
        %937 = vmatpush1.msra.mxu0 0.0
        %938 = vmatprep.subr.mxu0 0.0
        %939 = vmatpush1.msra.mxu0 0.0
        %940 = vmatprep.subr.mxu0 0.0
        %941 = vmatpush1.msra.mxu0 0.0
        %942 = vmatprep.subr.mxu0 0.0
        %943 = vmatpush1.msra.mxu0 0.0
        %944 = vmatprep.subr.mxu0 0.0
        %945 = vmatpush1.msra.mxu0 0.0
        %946 = vmatprep.subr.mxu0 0.0
        %947 = vmatpush1.msra.mxu0 0.0
        %948 = vmatprep.subr.mxu0 0.0
        %949 = vmatpush1.msra.mxu0 0.0
        %950 = vmatprep.subr.mxu0 0.0
        %951 = vmatpush1.msra.mxu0 0.0
        %952 = vmatprep.subr.mxu0 0.0
        %953 = vmatpush1.msra.mxu0 0.0
        %954 = vmatprep.subr.mxu0 0.0
        %955 = vmatpush1.msra.mxu0 0.0
        %956 = vmatprep.subr.mxu0 0.0
        %957 = vmatpush1.msra.mxu0 0.0
        %958 = vmatprep.subr.mxu0 0.0
        %959 = vmatpush1.msra.mxu0 0.0
        %960 = vmatprep.subr.mxu0 0.0
        %961 = vmatpush1.msra.mxu0 0.0
        %962 = vmatprep.subr.mxu0 0.0
        %963 = vmatpush1.msra.mxu0 0.0
        %964 = vmatprep.subr.mxu0 0.0
        %965 = vmatpush1.msra.mxu0 0.0
        %966 = vmatprep.subr.mxu0 0.0
        %967 = vmatpush1.msra.mxu0 0.0
        %968 = vmatprep.subr.mxu0 0.0
        %969 = vmatpush1.msra.mxu0 0.0
        %970 = vmatprep.subr.mxu0 0.0
        %971 = vmatpush1.msra.mxu0 0.0
        %972 = vmatprep.subr.mxu0 0.0
        %973 = vmatpush1.msra.mxu0 0.0
        %974 = vmatprep.subr.mxu0 0.0
        %975 = vmatpush1.msra.mxu0 0.0
        %976 = vmatprep.subr.mxu0 0.0
        %977 = vmatpush1.msra.mxu0 0.0
        %978 = vmatprep.subr.mxu0 0.0
        %979 = vmatpush1.msra.mxu0 0.0
        %980 = vmatprep.subr.mxu0 0.0
        %981 = vmatpush1.msra.mxu0 0.0
        %982 = vmatprep.subr.mxu0 0.0
        %983 = vmatpush1.msra.mxu0 0.0
        %984 = vmatprep.mubr.f32.mxu0 0.0
        %985 = vmatmul.mubr.f32.gmra.mrb[0].mxu0 %v841
        %v986 = vpop.f32.mrb[0].mxu0
        %v987 = vadd.f32 0.0, %v986
        %v988 = vpop.f32.mrb[0].mxu0
        %989 = vdwg.mxu0
        %v990 = vadd.f32 %v825, %v916
        %v991 = vadd.f32 %v826, %v918
        %v992 = vadd.f32 %v827, %v987
        %993 = vrot.lane.b32.xlu0 %v169, 108
        %v994 = vpop.permute.xlu0 %993
        %995 = vrot.lane.b32.xlu0 %v182, 108
        %v996 = vpop.permute.xlu0 %995
        %997 = vrot.lane.b32.xlu0 %v170, 108
        %v998 = vpop.permute.xlu0 %997
        %999 = vrot.lane.b32.xlu0 %v183, 108
        %v1000 = vpop.permute.xlu0 %999
        %vm1001 = vcmask 883712
        %v1002 = vsel %vm1001, %v994, %v996
        %v1003 = vsel %vm1001, %v996, %v998
        %v1004 = vsel %vm1001, %v998, %v1000
        %v1006 = vsel %vm196, %v176, 0
        %v1008 = vsel %vm200, %v1002, 0
        %v1010 = vsel %vm200, %v1003, 0
        %v1012 = vsel %vm200, %v1004, 0
        %1014 = vmatprep.subr.mxu0 %v1010
        %1015 = vmatpush1.msra.mxu0 %v1008
        %1016 = vmatprep.subr.mxu0 0.0
        %1017 = vmatpush1.msra.mxu0 0.0
        %1018 = vmatprep.subr.mxu0 0.0
        %1019 = vmatpush1.msra.mxu0 0.0
        %1020 = vmatprep.subr.mxu0 0.0
        %1021 = vmatpush1.msra.mxu0 0.0
        %1022 = vmatprep.subr.mxu0 0.0
        %1023 = vmatpush1.msra.mxu0 0.0
        %1024 = vmatprep.subr.mxu0 0.0
        %1025 = vmatpush1.msra.mxu0 0.0
        %1026 = vmatprep.subr.mxu0 0.0
        %1027 = vmatpush1.msra.mxu0 0.0
        %1028 = vmatprep.subr.mxu0 0.0
        %1029 = vmatpush1.msra.mxu0 0.0
        %1030 = vmatprep.subr.mxu0 0.0
        %1031 = vmatpush1.msra.mxu0 0.0
        %1032 = vmatprep.subr.mxu0 0.0
        %1033 = vmatpush1.msra.mxu0 0.0
        %1034 = vmatprep.subr.mxu0 0.0
        %1035 = vmatpush1.msra.mxu0 0.0
        %1036 = vmatprep.subr.mxu0 0.0
        %1037 = vmatpush1.msra.mxu0 0.0
        %1038 = vmatprep.subr.mxu0 0.0
        %1039 = vmatpush1.msra.mxu0 0.0
        %1040 = vmatprep.subr.mxu0 0.0
        %1041 = vmatpush1.msra.mxu0 0.0
        %1042 = vmatprep.subr.mxu0 0.0
        %1043 = vmatpush1.msra.mxu0 0.0
        %1044 = vmatprep.subr.mxu0 0.0
        %1045 = vmatpush1.msra.mxu0 0.0
        %1046 = vmatprep.subr.mxu0 0.0
        %1047 = vmatpush1.msra.mxu0 0.0
        %1048 = vmatprep.subr.mxu0 0.0
        %1049 = vmatpush1.msra.mxu0 0.0
        %1050 = vmatprep.subr.mxu0 0.0
        %1051 = vmatpush1.msra.mxu0 0.0
        %1052 = vmatprep.subr.mxu0 0.0
        %1053 = vmatpush1.msra.mxu0 0.0
        %1054 = vmatprep.subr.mxu0 0.0
        %1055 = vmatpush1.msra.mxu0 0.0
        %1056 = vmatprep.subr.mxu0 0.0
        %1057 = vmatpush1.msra.mxu0 0.0
        %1058 = vmatprep.subr.mxu0 0.0
        %1059 = vmatpush1.msra.mxu0 0.0
        %1060 = vmatprep.subr.mxu0 0.0
        %1061 = vmatpush1.msra.mxu0 0.0
        %1062 = vmatprep.subr.mxu0 0.0
        %1063 = vmatpush1.msra.mxu0 0.0
        %1064 = vmatprep.subr.mxu0 0.0
        %1065 = vmatpush1.msra.mxu0 0.0
        %1066 = vmatprep.subr.mxu0 0.0
        %1067 = vmatpush1.msra.mxu0 0.0
        %1068 = vmatprep.subr.mxu0 0.0
        %1069 = vmatpush1.msra.mxu0 0.0
        %1070 = vmatprep.subr.mxu0 0.0
        %1071 = vmatpush1.msra.mxu0 0.0
        %1072 = vmatprep.subr.mxu0 0.0
        %1073 = vmatpush1.msra.mxu0 0.0
        %1074 = vmatprep.subr.mxu0 0.0
        %1075 = vmatpush1.msra.mxu0 0.0
        %1076 = vmatprep.subr.mxu0 0.0
        %1077 = vmatpush1.msra.mxu0 0.0
        %1078 = vmatprep.mubr.f32.mxu0 0.0
        %1079 = vmatmul.mubr.f32.gmra.mrb[0].mxu0 %v1006
        %v1080 = vpop.f32.mrb[0].mxu0
        %v1081 = vadd.f32 0.0, %v1080
        %v1082 = vpop.f32.mrb[0].mxu0
        %v1083 = vadd.f32 0.0, %v1082
        %1084 = vdwg.mxu0
        %1085 = vmatprep.subr.mxu0 0.0
        %1086 = vmatpush1.msra.mxu0 %v1012
        %1087 = vmatprep.subr.mxu0 0.0
        %1088 = vmatpush1.msra.mxu0 0.0
        %1089 = vmatprep.subr.mxu0 0.0
        %1090 = vmatpush1.msra.mxu0 0.0
        %1091 = vmatprep.subr.mxu0 0.0
        %1092 = vmatpush1.msra.mxu0 0.0
        %1093 = vmatprep.subr.mxu0 0.0
        %1094 = vmatpush1.msra.mxu0 0.0
        %1095 = vmatprep.subr.mxu0 0.0
        %1096 = vmatpush1.msra.mxu0 0.0
        %1097 = vmatprep.subr.mxu0 0.0
        %1098 = vmatpush1.msra.mxu0 0.0
        %1099 = vmatprep.subr.mxu0 0.0
        %1100 = vmatpush1.msra.mxu0 0.0
        %1101 = vmatprep.subr.mxu0 0.0
        %1102 = vmatpush1.msra.mxu0 0.0
        %1103 = vmatprep.subr.mxu0 0.0
        %1104 = vmatpush1.msra.mxu0 0.0
        %1105 = vmatprep.subr.mxu0 0.0
        %1106 = vmatpush1.msra.mxu0 0.0
        %1107 = vmatprep.subr.mxu0 0.0
        %1108 = vmatpush1.msra.mxu0 0.0
        %1109 = vmatprep.subr.mxu0 0.0
        %1110 = vmatpush1.msra.mxu0 0.0
        %1111 = vmatprep.subr.mxu0 0.0
        %1112 = vmatpush1.msra.mxu0 0.0
        %1113 = vmatprep.subr.mxu0 0.0
        %1114 = vmatpush1.msra.mxu0 0.0
        %1115 = vmatprep.subr.mxu0 0.0
        %1116 = vmatpush1.msra.mxu0 0.0
        %1117 = vmatprep.subr.mxu0 0.0
        %1118 = vmatpush1.msra.mxu0 0.0
        %1119 = vmatprep.subr.mxu0 0.0
        %1120 = vmatpush1.msra.mxu0 0.0
        %1121 = vmatprep.subr.mxu0 0.0
        %1122 = vmatpush1.msra.mxu0 0.0
        %1123 = vmatprep.subr.mxu0 0.0
        %1124 = vmatpush1.msra.mxu0 0.0
        %1125 = vmatprep.subr.mxu0 0.0
        %1126 = vmatpush1.msra.mxu0 0.0
        %1127 = vmatprep.subr.mxu0 0.0
        %1128 = vmatpush1.msra.mxu0 0.0
        %1129 = vmatprep.subr.mxu0 0.0
        %1130 = vmatpush1.msra.mxu0 0.0
        %1131 = vmatprep.subr.mxu0 0.0
        %1132 = vmatpush1.msra.mxu0 0.0
        %1133 = vmatprep.subr.mxu0 0.0
        %1134 = vmatpush1.msra.mxu0 0.0
        %1135 = vmatprep.subr.mxu0 0.0
        %1136 = vmatpush1.msra.mxu0 0.0
        %1137 = vmatprep.subr.mxu0 0.0
        %1138 = vmatpush1.msra.mxu0 0.0
        %1139 = vmatprep.subr.mxu0 0.0
        %1140 = vmatpush1.msra.mxu0 0.0
        %1141 = vmatprep.subr.mxu0 0.0
        %1142 = vmatpush1.msra.mxu0 0.0
        %1143 = vmatprep.subr.mxu0 0.0
        %1144 = vmatpush1.msra.mxu0 0.0
        %1145 = vmatprep.subr.mxu0 0.0
        %1146 = vmatpush1.msra.mxu0 0.0
        %1147 = vmatprep.subr.mxu0 0.0
        %1148 = vmatpush1.msra.mxu0 0.0
        %1149 = vmatprep.mubr.f32.mxu0 0.0
        %1150 = vmatmul.mubr.f32.gmra.mrb[0].mxu0 %v1006
        %v1151 = vpop.f32.mrb[0].mxu0
        %v1152 = vadd.f32 0.0, %v1151
        %v1153 = vpop.f32.mrb[0].mxu0
        %1154 = vdwg.mxu0
        %v1155 = vadd.f32 %v990, %v1081
        %v1156 = vadd.f32 %v991, %v1083
        %v1157 = vadd.f32 %v992, %v1152
        %1158 = vrot.lane.b32.xlu0 %v169, 92
        %v1159 = vpop.permute.xlu0 %1158
        %1160 = vrot.lane.b32.xlu0 %v182, 92
        %v1161 = vpop.permute.xlu0 %1160
        %1162 = vrot.lane.b32.xlu0 %v170, 92
        %v1163 = vpop.permute.xlu0 %1162
        %1164 = vrot.lane.b32.xlu0 %v183, 92
        %v1165 = vpop.permute.xlu0 %1164
        %vm1166 = vcmask 752640
        %v1167 = vsel %vm1166, %v1159, %v1161
        %v1168 = vsel %vm1166, %v1161, %v1163
        %v1169 = vsel %vm1166, %v1163, %v1165
        %v1171 = vsel %vm196, %v177, 0
        %v1173 = vsel %vm200, %v1167, 0
        %v1175 = vsel %vm200, %v1168, 0
        %v1177 = vsel %vm200, %v1169, 0
        %1179 = vmatprep.subr.mxu0 %v1175
        %1180 = vmatpush1.msra.mxu0 %v1173
        %1181 = vmatprep.subr.mxu0 0.0
        %1182 = vmatpush1.msra.mxu0 0.0
        %1183 = vmatprep.subr.mxu0 0.0
        %1184 = vmatpush1.msra.mxu0 0.0
        %1185 = vmatprep.subr.mxu0 0.0
        %1186 = vmatpush1.msra.mxu0 0.0
        %1187 = vmatprep.subr.mxu0 0.0
        %1188 = vmatpush1.msra.mxu0 0.0
        %1189 = vmatprep.subr.mxu0 0.0
        %1190 = vmatpush1.msra.mxu0 0.0
        %1191 = vmatprep.subr.mxu0 0.0
        %1192 = vmatpush1.msra.mxu0 0.0
        %1193 = vmatprep.subr.mxu0 0.0
        %1194 = vmatpush1.msra.mxu0 0.0
        %1195 = vmatprep.subr.mxu0 0.0
        %1196 = vmatpush1.msra.mxu0 0.0
        %1197 = vmatprep.subr.mxu0 0.0
        %1198 = vmatpush1.msra.mxu0 0.0
        %1199 = vmatprep.subr.mxu0 0.0
        %1200 = vmatpush1.msra.mxu0 0.0
        %1201 = vmatprep.subr.mxu0 0.0
        %1202 = vmatpush1.msra.mxu0 0.0
        %1203 = vmatprep.subr.mxu0 0.0
        %1204 = vmatpush1.msra.mxu0 0.0
        %1205 = vmatprep.subr.mxu0 0.0
        %1206 = vmatpush1.msra.mxu0 0.0
        %1207 = vmatprep.subr.mxu0 0.0
        %1208 = vmatpush1.msra.mxu0 0.0
        %1209 = vmatprep.subr.mxu0 0.0
        %1210 = vmatpush1.msra.mxu0 0.0
        %1211 = vmatprep.subr.mxu0 0.0
        %1212 = vmatpush1.msra.mxu0 0.0
        %1213 = vmatprep.subr.mxu0 0.0
        %1214 = vmatpush1.msra.mxu0 0.0
        %1215 = vmatprep.subr.mxu0 0.0
        %1216 = vmatpush1.msra.mxu0 0.0
        %1217 = vmatprep.subr.mxu0 0.0
        %1218 = vmatpush1.msra.mxu0 0.0
        %1219 = vmatprep.subr.mxu0 0.0
        %1220 = vmatpush1.msra.mxu0 0.0
        %1221 = vmatprep.subr.mxu0 0.0
        %1222 = vmatpush1.msra.mxu0 0.0
        %1223 = vmatprep.subr.mxu0 0.0
        %1224 = vmatpush1.msra.mxu0 0.0
        %1225 = vmatprep.subr.mxu0 0.0
        %1226 = vmatpush1.msra.mxu0 0.0
        %1227 = vmatprep.subr.mxu0 0.0
        %1228 = vmatpush1.msra.mxu0 0.0
        %1229 = vmatprep.subr.mxu0 0.0
        %1230 = vmatpush1.msra.mxu0 0.0
        %1231 = vmatprep.subr.mxu0 0.0
        %1232 = vmatpush1.msra.mxu0 0.0
        %1233 = vmatprep.subr.mxu0 0.0
        %1234 = vmatpush1.msra.mxu0 0.0
        %1235 = vmatprep.subr.mxu0 0.0
        %1236 = vmatpush1.msra.mxu0 0.0
        %1237 = vmatprep.subr.mxu0 0.0
        %1238 = vmatpush1.msra.mxu0 0.0
        %1239 = vmatprep.subr.mxu0 0.0
        %1240 = vmatpush1.msra.mxu0 0.0
        %1241 = vmatprep.subr.mxu0 0.0
        %1242 = vmatpush1.msra.mxu0 0.0
        %1243 = vmatprep.mubr.f32.mxu0 0.0
        %1244 = vmatmul.mubr.f32.gmra.mrb[0].mxu0 %v1171
        %v1245 = vpop.f32.mrb[0].mxu0
        %v1246 = vadd.f32 0.0, %v1245
        %v1247 = vpop.f32.mrb[0].mxu0
        %v1248 = vadd.f32 0.0, %v1247
        %1249 = vdwg.mxu0
        %1250 = vmatprep.subr.mxu0 0.0
        %1251 = vmatpush1.msra.mxu0 %v1177
        %1252 = vmatprep.subr.mxu0 0.0
        %1253 = vmatpush1.msra.mxu0 0.0
        %1254 = vmatprep.subr.mxu0 0.0
        %1255 = vmatpush1.msra.mxu0 0.0
        %1256 = vmatprep.subr.mxu0 0.0
        %1257 = vmatpush1.msra.mxu0 0.0
        %1258 = vmatprep.subr.mxu0 0.0
        %1259 = vmatpush1.msra.mxu0 0.0
        %1260 = vmatprep.subr.mxu0 0.0
        %1261 = vmatpush1.msra.mxu0 0.0
        %1262 = vmatprep.subr.mxu0 0.0
        %1263 = vmatpush1.msra.mxu0 0.0
        %1264 = vmatprep.subr.mxu0 0.0
        %1265 = vmatpush1.msra.mxu0 0.0
        %1266 = vmatprep.subr.mxu0 0.0
        %1267 = vmatpush1.msra.mxu0 0.0
        %1268 = vmatprep.subr.mxu0 0.0
        %1269 = vmatpush1.msra.mxu0 0.0
        %1270 = vmatprep.subr.mxu0 0.0
        %1271 = vmatpush1.msra.mxu0 0.0
        %1272 = vmatprep.subr.mxu0 0.0
        %1273 = vmatpush1.msra.mxu0 0.0
        %1274 = vmatprep.subr.mxu0 0.0
        %1275 = vmatpush1.msra.mxu0 0.0
        %1276 = vmatprep.subr.mxu0 0.0
        %1277 = vmatpush1.msra.mxu0 0.0
        %1278 = vmatprep.subr.mxu0 0.0
        %1279 = vmatpush1.msra.mxu0 0.0
        %1280 = vmatprep.subr.mxu0 0.0
        %1281 = vmatpush1.msra.mxu0 0.0
        %1282 = vmatprep.subr.mxu0 0.0
        %1283 = vmatpush1.msra.mxu0 0.0
        %1284 = vmatprep.subr.mxu0 0.0
        %1285 = vmatpush1.msra.mxu0 0.0
        %1286 = vmatprep.subr.mxu0 0.0
        %1287 = vmatpush1.msra.mxu0 0.0
        %1288 = vmatprep.subr.mxu0 0.0
        %1289 = vmatpush1.msra.mxu0 0.0
        %1290 = vmatprep.subr.mxu0 0.0
        %1291 = vmatpush1.msra.mxu0 0.0
        %1292 = vmatprep.subr.mxu0 0.0
        %1293 = vmatpush1.msra.mxu0 0.0
        %1294 = vmatprep.subr.mxu0 0.0
        %1295 = vmatpush1.msra.mxu0 0.0
        %1296 = vmatprep.subr.mxu0 0.0
        %1297 = vmatpush1.msra.mxu0 0.0
        %1298 = vmatprep.subr.mxu0 0.0
        %1299 = vmatpush1.msra.mxu0 0.0
        %1300 = vmatprep.subr.mxu0 0.0
        %1301 = vmatpush1.msra.mxu0 0.0
        %1302 = vmatprep.subr.mxu0 0.0
        %1303 = vmatpush1.msra.mxu0 0.0
        %1304 = vmatprep.subr.mxu0 0.0
        %1305 = vmatpush1.msra.mxu0 0.0
        %1306 = vmatprep.subr.mxu0 0.0
        %1307 = vmatpush1.msra.mxu0 0.0
        %1308 = vmatprep.subr.mxu0 0.0
        %1309 = vmatpush1.msra.mxu0 0.0
        %1310 = vmatprep.subr.mxu0 0.0
        %1311 = vmatpush1.msra.mxu0 0.0
        %1312 = vmatprep.subr.mxu0 0.0
        %1313 = vmatpush1.msra.mxu0 0.0
        %1314 = vmatprep.mubr.f32.mxu0 0.0
        %1315 = vmatmul.mubr.f32.gmra.mrb[0].mxu0 %v1171
        %v1316 = vpop.f32.mrb[0].mxu0
        %v1317 = vadd.f32 0.0, %v1316
        %v1318 = vpop.f32.mrb[0].mxu0
        %1319 = vdwg.mxu0
        %v1320 = vadd.f32 %v1155, %v1246
        %v1321 = vadd.f32 %v1156, %v1248
        %v1322 = vadd.f32 %v1157, %v1317
        %1323 = vrot.lane.b32.xlu0 %v169, 91
        %v1324 = vpop.permute.xlu0 %1323
        %1325 = vrot.lane.b32.xlu0 %v182, 91
        %v1326 = vpop.permute.xlu0 %1325
        %1327 = vrot.lane.b32.xlu0 %v170, 91
        %v1328 = vpop.permute.xlu0 %1327
        %1329 = vrot.lane.b32.xlu0 %v183, 91
        %v1330 = vpop.permute.xlu0 %1329
        %vm1331 = vcmask 744448
        %v1332 = vsel %vm1331, %v1324, %v1326
        %v1333 = vsel %vm1331, %v1326, %v1328
        %v1334 = vsel %vm1331, %v1328, %v1330
        %v1336 = vsel %vm196, %v178, 0
        %v1338 = vsel %vm200, %v1332, 0
        %v1340 = vsel %vm200, %v1333, 0
        %v1342 = vsel %vm200, %v1334, 0
        %1344 = vmatprep.subr.mxu0 %v1340
        %1345 = vmatpush1.msra.mxu0 %v1338
        %1346 = vmatprep.subr.mxu0 0.0
        %1347 = vmatpush1.msra.mxu0 0.0
        %1348 = vmatprep.subr.mxu0 0.0
        %1349 = vmatpush1.msra.mxu0 0.0
        %1350 = vmatprep.subr.mxu0 0.0
        %1351 = vmatpush1.msra.mxu0 0.0
        %1352 = vmatprep.subr.mxu0 0.0
        %1353 = vmatpush1.msra.mxu0 0.0
        %1354 = vmatprep.subr.mxu0 0.0
        %1355 = vmatpush1.msra.mxu0 0.0
        %1356 = vmatprep.subr.mxu0 0.0
        %1357 = vmatpush1.msra.mxu0 0.0
        %1358 = vmatprep.subr.mxu0 0.0
        %1359 = vmatpush1.msra.mxu0 0.0
        %1360 = vmatprep.subr.mxu0 0.0
        %1361 = vmatpush1.msra.mxu0 0.0
        %1362 = vmatprep.subr.mxu0 0.0
        %1363 = vmatpush1.msra.mxu0 0.0
        %1364 = vmatprep.subr.mxu0 0.0
        %1365 = vmatpush1.msra.mxu0 0.0
        %1366 = vmatprep.subr.mxu0 0.0
        %1367 = vmatpush1.msra.mxu0 0.0
        %1368 = vmatprep.subr.mxu0 0.0
        %1369 = vmatpush1.msra.mxu0 0.0
        %1370 = vmatprep.subr.mxu0 0.0
        %1371 = vmatpush1.msra.mxu0 0.0
        %1372 = vmatprep.subr.mxu0 0.0
        %1373 = vmatpush1.msra.mxu0 0.0
        %1374 = vmatprep.subr.mxu0 0.0
        %1375 = vmatpush1.msra.mxu0 0.0
        %1376 = vmatprep.subr.mxu0 0.0
        %1377 = vmatpush1.msra.mxu0 0.0
        %1378 = vmatprep.subr.mxu0 0.0
        %1379 = vmatpush1.msra.mxu0 0.0
        %1380 = vmatprep.subr.mxu0 0.0
        %1381 = vmatpush1.msra.mxu0 0.0
        %1382 = vmatprep.subr.mxu0 0.0
        %1383 = vmatpush1.msra.mxu0 0.0
        %1384 = vmatprep.subr.mxu0 0.0
        %1385 = vmatpush1.msra.mxu0 0.0
        %1386 = vmatprep.subr.mxu0 0.0
        %1387 = vmatpush1.msra.mxu0 0.0
        %1388 = vmatprep.subr.mxu0 0.0
        %1389 = vmatpush1.msra.mxu0 0.0
        %1390 = vmatprep.subr.mxu0 0.0
        %1391 = vmatpush1.msra.mxu0 0.0
        %1392 = vmatprep.subr.mxu0 0.0
        %1393 = vmatpush1.msra.mxu0 0.0
        %1394 = vmatprep.subr.mxu0 0.0
        %1395 = vmatpush1.msra.mxu0 0.0
        %1396 = vmatprep.subr.mxu0 0.0
        %1397 = vmatpush1.msra.mxu0 0.0
        %1398 = vmatprep.subr.mxu0 0.0
        %1399 = vmatpush1.msra.mxu0 0.0
        %1400 = vmatprep.subr.mxu0 0.0
        %1401 = vmatpush1.msra.mxu0 0.0
        %1402 = vmatprep.subr.mxu0 0.0
        %1403 = vmatpush1.msra.mxu0 0.0
        %1404 = vmatprep.subr.mxu0 0.0
        %1405 = vmatpush1.msra.mxu0 0.0
        %1406 = vmatprep.subr.mxu0 0.0
        %1407 = vmatpush1.msra.mxu0 0.0
        %1408 = vmatprep.mubr.f32.mxu0 0.0
        %1409 = vmatmul.mubr.f32.gmra.mrb[0].mxu0 %v1336
        %v1410 = vpop.f32.mrb[0].mxu0
        %v1411 = vadd.f32 0.0, %v1410
        %v1412 = vpop.f32.mrb[0].mxu0
        %v1413 = vadd.f32 0.0, %v1412
        %1414 = vdwg.mxu0
        %1415 = vmatprep.subr.mxu0 0.0
        %1416 = vmatpush1.msra.mxu0 %v1342
        %1417 = vmatprep.subr.mxu0 0.0
        %1418 = vmatpush1.msra.mxu0 0.0
        %1419 = vmatprep.subr.mxu0 0.0
        %1420 = vmatpush1.msra.mxu0 0.0
        %1421 = vmatprep.subr.mxu0 0.0
        %1422 = vmatpush1.msra.mxu0 0.0
        %1423 = vmatprep.subr.mxu0 0.0
        %1424 = vmatpush1.msra.mxu0 0.0
        %1425 = vmatprep.subr.mxu0 0.0
        %1426 = vmatpush1.msra.mxu0 0.0
        %1427 = vmatprep.subr.mxu0 0.0
        %1428 = vmatpush1.msra.mxu0 0.0
        %1429 = vmatprep.subr.mxu0 0.0
        %1430 = vmatpush1.msra.mxu0 0.0
        %1431 = vmatprep.subr.mxu0 0.0
        %1432 = vmatpush1.msra.mxu0 0.0
        %1433 = vmatprep.subr.mxu0 0.0
        %1434 = vmatpush1.msra.mxu0 0.0
        %1435 = vmatprep.subr.mxu0 0.0
        %1436 = vmatpush1.msra.mxu0 0.0
        %1437 = vmatprep.subr.mxu0 0.0
        %1438 = vmatpush1.msra.mxu0 0.0
        %1439 = vmatprep.subr.mxu0 0.0
        %1440 = vmatpush1.msra.mxu0 0.0
        %1441 = vmatprep.subr.mxu0 0.0
        %1442 = vmatpush1.msra.mxu0 0.0
        %1443 = vmatprep.subr.mxu0 0.0
        %1444 = vmatpush1.msra.mxu0 0.0
        %1445 = vmatprep.subr.mxu0 0.0
        %1446 = vmatpush1.msra.mxu0 0.0
        %1447 = vmatprep.subr.mxu0 0.0
        %1448 = vmatpush1.msra.mxu0 0.0
        %1449 = vmatprep.subr.mxu0 0.0
        %1450 = vmatpush1.msra.mxu0 0.0
        %1451 = vmatprep.subr.mxu0 0.0
        %1452 = vmatpush1.msra.mxu0 0.0
        %1453 = vmatprep.subr.mxu0 0.0
        %1454 = vmatpush1.msra.mxu0 0.0
        %1455 = vmatprep.subr.mxu0 0.0
        %1456 = vmatpush1.msra.mxu0 0.0
        %1457 = vmatprep.subr.mxu0 0.0
        %1458 = vmatpush1.msra.mxu0 0.0
        %1459 = vmatprep.subr.mxu0 0.0
        %1460 = vmatpush1.msra.mxu0 0.0
        %1461 = vmatprep.subr.mxu0 0.0
        %1462 = vmatpush1.msra.mxu0 0.0
        %1463 = vmatprep.subr.mxu0 0.0
        %1464 = vmatpush1.msra.mxu0 0.0
        %1465 = vmatprep.subr.mxu0 0.0
        %1466 = vmatpush1.msra.mxu0 0.0
        %1467 = vmatprep.subr.mxu0 0.0
        %1468 = vmatpush1.msra.mxu0 0.0
        %1469 = vmatprep.subr.mxu0 0.0
        %1470 = vmatpush1.msra.mxu0 0.0
        %1471 = vmatprep.subr.mxu0 0.0
        %1472 = vmatpush1.msra.mxu0 0.0
        %1473 = vmatprep.subr.mxu0 0.0
        %1474 = vmatpush1.msra.mxu0 0.0
        %1475 = vmatprep.subr.mxu0 0.0
        %1476 = vmatpush1.msra.mxu0 0.0
        %1477 = vmatprep.subr.mxu0 0.0
        %1478 = vmatpush1.msra.mxu0 0.0
        %1479 = vmatprep.mubr.f32.mxu0 0.0
        %1480 = vmatmul.mubr.f32.gmra.mrb[0].mxu0 %v1336
        %v1481 = vpop.f32.mrb[0].mxu0
        %v1482 = vadd.f32 0.0, %v1481
        %v1483 = vpop.f32.mrb[0].mxu0
        %1484 = vdwg.mxu0
        %v1485 = vadd.f32 %v1320, %v1411
        %v1486 = vadd.f32 %v1321, %v1413
        %v1487 = vadd.f32 %v1322, %v1482
        %1488 = vrot.lane.b32.xlu0 %v169, 90
        %v1489 = vpop.permute.xlu0 %1488
        %1490 = vrot.lane.b32.xlu0 %v182, 90
        %v1491 = vpop.permute.xlu0 %1490
        %1492 = vrot.lane.b32.xlu0 %v170, 90
        %v1493 = vpop.permute.xlu0 %1492
        %1494 = vrot.lane.b32.xlu0 %v183, 90
        %v1495 = vpop.permute.xlu0 %1494
        %vm1496 = vcmask 736256
        %v1497 = vsel %vm1496, %v1489, %v1491
        %v1498 = vsel %vm1496, %v1491, %v1493
        %v1499 = vsel %vm1496, %v1493, %v1495
        %v1501 = vsel %vm196, %v179, 0
        %v1503 = vsel %vm200, %v1497, 0
        %v1505 = vsel %vm200, %v1498, 0
        %v1507 = vsel %vm200, %v1499, 0
        %1509 = vmatprep.subr.mxu0 %v1505
        %1510 = vmatpush1.msra.mxu0 %v1503
        %1511 = vmatprep.subr.mxu0 0.0
        %1512 = vmatpush1.msra.mxu0 0.0
        %1513 = vmatprep.subr.mxu0 0.0
        %1514 = vmatpush1.msra.mxu0 0.0
        %1515 = vmatprep.subr.mxu0 0.0
        %1516 = vmatpush1.msra.mxu0 0.0
        %1517 = vmatprep.subr.mxu0 0.0
        %1518 = vmatpush1.msra.mxu0 0.0
        %1519 = vmatprep.subr.mxu0 0.0
        %1520 = vmatpush1.msra.mxu0 0.0
        %1521 = vmatprep.subr.mxu0 0.0
        %1522 = vmatpush1.msra.mxu0 0.0
        %1523 = vmatprep.subr.mxu0 0.0
        %1524 = vmatpush1.msra.mxu0 0.0
        %1525 = vmatprep.subr.mxu0 0.0
        %1526 = vmatpush1.msra.mxu0 0.0
        %1527 = vmatprep.subr.mxu0 0.0
        %1528 = vmatpush1.msra.mxu0 0.0
        %1529 = vmatprep.subr.mxu0 0.0
        %1530 = vmatpush1.msra.mxu0 0.0
        %1531 = vmatprep.subr.mxu0 0.0
        %1532 = vmatpush1.msra.mxu0 0.0
        %1533 = vmatprep.subr.mxu0 0.0
        %1534 = vmatpush1.msra.mxu0 0.0
        %1535 = vmatprep.subr.mxu0 0.0
        %1536 = vmatpush1.msra.mxu0 0.0
        %1537 = vmatprep.subr.mxu0 0.0
        %1538 = vmatpush1.msra.mxu0 0.0
        %1539 = vmatprep.subr.mxu0 0.0
        %1540 = vmatpush1.msra.mxu0 0.0
        %1541 = vmatprep.subr.mxu0 0.0
        %1542 = vmatpush1.msra.mxu0 0.0
        %1543 = vmatprep.subr.mxu0 0.0
        %1544 = vmatpush1.msra.mxu0 0.0
        %1545 = vmatprep.subr.mxu0 0.0
        %1546 = vmatpush1.msra.mxu0 0.0
        %1547 = vmatprep.subr.mxu0 0.0
        %1548 = vmatpush1.msra.mxu0 0.0
        %1549 = vmatprep.subr.mxu0 0.0
        %1550 = vmatpush1.msra.mxu0 0.0
        %1551 = vmatprep.subr.mxu0 0.0
        %1552 = vmatpush1.msra.mxu0 0.0
        %1553 = vmatprep.subr.mxu0 0.0
        %1554 = vmatpush1.msra.mxu0 0.0
        %1555 = vmatprep.subr.mxu0 0.0
        %1556 = vmatpush1.msra.mxu0 0.0
        %1557 = vmatprep.subr.mxu0 0.0
        %1558 = vmatpush1.msra.mxu0 0.0
        %1559 = vmatprep.subr.mxu0 0.0
        %1560 = vmatpush1.msra.mxu0 0.0
        %1561 = vmatprep.subr.mxu0 0.0
        %1562 = vmatpush1.msra.mxu0 0.0
        %1563 = vmatprep.subr.mxu0 0.0
        %1564 = vmatpush1.msra.mxu0 0.0
        %1565 = vmatprep.subr.mxu0 0.0
        %1566 = vmatpush1.msra.mxu0 0.0
        %1567 = vmatprep.subr.mxu0 0.0
        %1568 = vmatpush1.msra.mxu0 0.0
        %1569 = vmatprep.subr.mxu0 0.0
        %1570 = vmatpush1.msra.mxu0 0.0
        %1571 = vmatprep.subr.mxu0 0.0
        %1572 = vmatpush1.msra.mxu0 0.0
        %1573 = vmatprep.mubr.f32.mxu0 0.0
        %1574 = vmatmul.mubr.f32.gmra.mrb[0].mxu0 %v1501
        %v1575 = vpop.f32.mrb[0].mxu0
        %v1576 = vadd.f32 0.0, %v1575
        %v1577 = vpop.f32.mrb[0].mxu0
        %v1578 = vadd.f32 0.0, %v1577
        %1579 = vdwg.mxu0
        %1580 = vmatprep.subr.mxu0 0.0
        %1581 = vmatpush1.msra.mxu0 %v1507
        %1582 = vmatprep.subr.mxu0 0.0
        %1583 = vmatpush1.msra.mxu0 0.0
        %1584 = vmatprep.subr.mxu0 0.0
        %1585 = vmatpush1.msra.mxu0 0.0
        %1586 = vmatprep.subr.mxu0 0.0
        %1587 = vmatpush1.msra.mxu0 0.0
        %1588 = vmatprep.subr.mxu0 0.0
        %1589 = vmatpush1.msra.mxu0 0.0
        %1590 = vmatprep.subr.mxu0 0.0
        %1591 = vmatpush1.msra.mxu0 0.0
        %1592 = vmatprep.subr.mxu0 0.0
        %1593 = vmatpush1.msra.mxu0 0.0
        %1594 = vmatprep.subr.mxu0 0.0
        %1595 = vmatpush1.msra.mxu0 0.0
        %1596 = vmatprep.subr.mxu0 0.0
        %1597 = vmatpush1.msra.mxu0 0.0
        %1598 = vmatprep.subr.mxu0 0.0
        %1599 = vmatpush1.msra.mxu0 0.0
        %1600 = vmatprep.subr.mxu0 0.0
        %1601 = vmatpush1.msra.mxu0 0.0
        %1602 = vmatprep.subr.mxu0 0.0
        %1603 = vmatpush1.msra.mxu0 0.0
        %1604 = vmatprep.subr.mxu0 0.0
        %1605 = vmatpush1.msra.mxu0 0.0
        %1606 = vmatprep.subr.mxu0 0.0
        %1607 = vmatpush1.msra.mxu0 0.0
        %1608 = vmatprep.subr.mxu0 0.0
        %1609 = vmatpush1.msra.mxu0 0.0
        %1610 = vmatprep.subr.mxu0 0.0
        %1611 = vmatpush1.msra.mxu0 0.0
        %1612 = vmatprep.subr.mxu0 0.0
        %1613 = vmatpush1.msra.mxu0 0.0
        %1614 = vmatprep.subr.mxu0 0.0
        %1615 = vmatpush1.msra.mxu0 0.0
        %1616 = vmatprep.subr.mxu0 0.0
        %1617 = vmatpush1.msra.mxu0 0.0
        %1618 = vmatprep.subr.mxu0 0.0
        %1619 = vmatpush1.msra.mxu0 0.0
        %1620 = vmatprep.subr.mxu0 0.0
        %1621 = vmatpush1.msra.mxu0 0.0
        %1622 = vmatprep.subr.mxu0 0.0
        %1623 = vmatpush1.msra.mxu0 0.0
        %1624 = vmatprep.subr.mxu0 0.0
        %1625 = vmatpush1.msra.mxu0 0.0
        %1626 = vmatprep.subr.mxu0 0.0
        %1627 = vmatpush1.msra.mxu0 0.0
        %1628 = vmatprep.subr.mxu0 0.0
        %1629 = vmatpush1.msra.mxu0 0.0
        %1630 = vmatprep.subr.mxu0 0.0
        %1631 = vmatpush1.msra.mxu0 0.0
        %1632 = vmatprep.subr.mxu0 0.0
        %1633 = vmatpush1.msra.mxu0 0.0
        %1634 = vmatprep.subr.mxu0 0.0
        %1635 = vmatpush1.msra.mxu0 0.0
        %1636 = vmatprep.subr.mxu0 0.0
        %1637 = vmatpush1.msra.mxu0 0.0
        %1638 = vmatprep.subr.mxu0 0.0
        %1639 = vmatpush1.msra.mxu0 0.0
        %1640 = vmatprep.subr.mxu0 0.0
        %1641 = vmatpush1.msra.mxu0 0.0
        %1642 = vmatprep.subr.mxu0 0.0
        %1643 = vmatpush1.msra.mxu0 0.0
        %1644 = vmatprep.mubr.f32.mxu0 0.0
        %1645 = vmatmul.mubr.f32.gmra.mrb[0].mxu0 %v1501
        %v1646 = vpop.f32.mrb[0].mxu0
        %v1647 = vadd.f32 0.0, %v1646
        %v1648 = vpop.f32.mrb[0].mxu0
        %1649 = vdwg.mxu0
        %v1650 = vadd.f32 %v1485, %v1576
        %v1651 = vadd.f32 %v1486, %v1578
        %v1652 = vadd.f32 %v1487, %v1647
        %v1653 = vld [vmem:[%s2] sm:$0xff]
        %1655 = vset.pattern.permute.xlu0 0
        %1656 = vperm.xlu0 %1655, %v1653
        %v1657 = vpop.permute.xlu0 %1656
        %v1659 = vadd.f32 %v1650, %v1657
        %v1660 = vadd.f32 %v1651, %v1657
        %v1661 = vadd.f32 %v1652, %v1657
        %1662 = vrot.lane.b32.xlu0 %v1659, 18
        %v1663 = vpop.permute.xlu0 %1662
        %1664 = vrot.lane.b32.xlu0 %v1660, 18
        %v1665 = vpop.permute.xlu0 %1664
        %1666 = vrot.lane.b32.xlu0 %v1661, 18
        %v1667 = vpop.permute.xlu0 %1666
        %v1668 = vlaneseq
        %v1669 = vand.u32 %v1668, 127
        %vm1670 = vcmp.lt.s32.totalorder %v1669, 18
        %v1671 = vsel %vm1670, %v1665, %v1667
        %v1672 = vsel %vm1670, %v1663, %v1665
        %v1673 = vsel %vm1670, %v1667, %v1663
        %1674 = vrot.lane.b32.xlu0 %v1659, 110
        %v1675 = vpop.permute.xlu0 %1674
        %1676 = vrot.lane.b32.xlu0 %v1660, 110
        %v1677 = vpop.permute.xlu0 %1676
        %1678 = vrot.lane.b32.xlu0 %v1661, 110
        %v1679 = vpop.permute.xlu0 %1678
        %vm1680 = vcmp.lt.s32.totalorder %v1669, 110
        %v1681 = vsel %vm1680, %v1677, %v1679
        %v1682 = vsel %vm1680, %v1675, %v1677
        %v1683 = vsel %vm1680, %v1679, %v1675
        %v1684 = vsub.f32 %v1673, %v1682
        %v1685 = vsub.f32 %v1672, %v1681
        %v1686 = vsub.f32 %v1671, %v1683
        %v1687 = vand.u32 2147483647, %v1684
        %v1688 = vand.u32 2147483647, %v1685
        %v1689 = vand.u32 2147483647, %v1686
        %v1690 = vadd.s32 %v1669, 128
        %v1691 = vadd.s32 %v1669, 256
        %v1692 = vlaneseq
        %v1693 = vshrl.u32 %v1692, 7
        %vm1694 = vcmp.ge.s32.totalorder %v1669, 18
        %vm1695 = vcmp.ge.s32.totalorder %v1690, 18
        %vm1696 = vcmp.ge.s32.totalorder %v1691, 18
        %vm1697 = vcmp.lt.s32.totalorder %v1669, 270
        %vm1698 = vcmp.lt.s32.totalorder %v1690, 270
        %vm1699 = vcmp.lt.s32.totalorder %v1691, 270
        %vm1700 = vmand %vm1694, %vm1697
        %vm1701 = vmand %vm1695, %vm1698
        %vm1702 = vmand %vm1696, %vm1699
        %vm1703 = vcmp.lt.s32.totalorder %v1693, 2
        %v1704 = vsel %vm1700, 1, 0
        %v1705 = vsel %vm1701, 1, 0
        %v1706 = vsel %vm1702, 1, 0
        %vm1707 = vcmp.eq.s32.totalorder %v1704, 1
        %vm1708 = vcmp.eq.s32.totalorder %v1705, 1
        %vm1709 = vcmp.eq.s32.totalorder %v1706, 1
        %v1710 = vsel %vm1703, 1, 0
        %vm1711 = vcmp.eq.s32.totalorder %v1710, 1
        %vm1712 = vmand %vm1707, %vm1711
        %vm1713 = vmand %vm1708, %vm1711
        %vm1714 = vmand %vm1709, %vm1711
        %v1715 = vsel %vm1712, %v1687, 0.0
        %v1716 = vsel %vm1713, %v1688, 0.0
        %v1717 = vsel %vm1714, %v1689, 0.0
        %v1718 = vadd.f32 %v1659, %v1715
        %v1719 = vadd.f32 %v1660, %v1716
        %v1720 = vadd.f32 %v1661, %v1717
        %1721 = vst [vmem:[%s163] sm:$0xff] %v1718
        %1722 = vst [vmem:[%s163 + $0x8] sm:$0xff] %v1719
        %1723 = vst [vmem:[%s163 + $0x10] sm:$0xff] %v1720
        %s1724 = sand.u32 %s93, 1
        %s1725 = scalar_lea.sflag [#allocation3], %s1724
        %s1726 = sand.u32 %s93, 1
        %s1727 = smul.addr %s1726, 24
        %s1728 = scalar_lea.vmem [#allocation2], %s1727
        // Predicated region
        $region33: #{tpu_custom_call.1} parent=31 // pred_check
          %p1729 = pneg %p103
        $region34: #{tpu_custom_call.1} parent=31 // pred_check_branch
          %1731 = sbr.rel (%p1729) target = $region36
        $region35: #{tpu_custom_call.1} parent=31 // pred_region
          %s1733 = ssub.s32 384, 384
          %1734 = vsyncadd %s1725, %s1733
          %s1735 = smul.addr %s17, 3
          %s1736 = smul.addr %s1735, 128
          %s1737 = scalar_lea.hbm %s3, %s1736
          %s1739 = sshll.u32 %s1728, 4
          %s1740 = int_to_ptr.vmem [resolvable:$true] %s1739
          %1742 = dma.vmem_to_hbm [thread:$0]  %s1740, 384, %s1737, %s1725
        $region36: #{tpu_custom_call.1} parent=31 // pred_fallthru
          _
      $region32: #{tpu_custom_call.1} parent=5 // pred_fallthru
        _
      %p1743 = scmp.le.s32.totalorder 2, %s12
      // Predicated region
      $region37: #{tpu_custom_call.1} parent=5 // pred_check
        %p1744 = pneg %p1743
      $region38: #{tpu_custom_call.1} parent=5 // pred_check_branch
        %1746 = sbr.rel (%p1744) target = $region40
      $region39: #{tpu_custom_call.1} parent=5 // pred_region
        %s1747 = ssub.s32 %s12, 2
        // Predicated region
        $region41: #{tpu_custom_call.1} parent=39 // pred_check
          %p1748 = pneg %p109
        $region42: #{tpu_custom_call.1} parent=39 // pred_check_branch
          %1750 = sbr.rel (%p1748) target = $region44
        $region43: #{tpu_custom_call.1} parent=39 // pred_region
          %s1751 = sand.u32 %s94, 1
          %s1752 = scalar_lea.sflag [#allocation3], %s1751
          %s1753 = sand.u32 %s94, 1
          %s1754 = smul.addr %s1753, 24
          %s1755 = scalar_lea.vmem [#allocation2], %s1754
          %1756 = dma.done %s1752, 384
        $region44: #{tpu_custom_call.1} parent=39 // pred_fallthru
          _
      $region40: #{tpu_custom_call.1} parent=5 // pred_fallthru
        _
    $region6: #{tpu_custom_call.1} parent=1 // loop_footer
      %s16 = sadd.s32 1, %s12
    $region7: #{tpu_custom_call.1} parent=1 // loop_footer_branch
      %11 = sbr.rel target = $region3
    $region8: #{tpu_custom_call.1} parent=1 // loop_exit
      _
    %1757 = vsyncpa [#allocation3], 1
    %s1758 = scalar_lea.sflag [#allocation3], 1
    %1759 = vsyncpa %s1758, 1

</llo_original>
